<compile_context>
chip_gen: v7x
topology: tpu7x:2x2x1
jax: 0.10.0
libtpu: 0.0.40
codegen_flags: <defaults>
</compile_context>

<pallas_src>
import math

import jax
import jax.numpy as jnp
from jax import lax
from jax.experimental import pallas as pl
from jax.experimental.pallas import tpu as pltpu

# ----------------------- small config (scaled down) --------------------------
B        = 2               # batch
N_INST   = 4               # num_instances        (ref: 10)
T_IMG    = 8               # tokens per image     (ref: 49 -> pad to 56 at ref)
D        = 128             # input_size           (ref: 768) -- lane-friendly
E        = 64              # eeg_size             (ref: 384)
S_EEG    = 8               # eeg sequence length  (ref: 32)
H        = 4               # num_heads            (ref: 12)
DH       = D // H
FF       = 256             # dim_feedforward      (ref: 2048)
N_LAYERS = 2               # encoder layers       (ref: 6)
K_SEL    = 3               # num_select
Q_TOK    = K_SEL * T_IMG   # num_queries          (ref: 147 = 3*49)
C        = 4               # num_classes
C_PAD    = 128             # lane-padded logits width (sliced to C in wrapper)
TD       = T_IMG * D       # flattened per-instance feature
L_SEQ    = 1 + Q_TOK + S_EEG          # 33
L_PAD    = ((L_SEQ + 7) // 8) * 8     # 40 -- sublane-aligned
R_ALL    = B * L_PAD                  # all samples' rows stacked
LN_EPS   = 1e-5
SCALE    = 1.0 / math.sqrt(DH)
NEG_INF  = -1e30

# AMIL tiling (reference scale needs this; at toy scale 2x2 tiles demo the pattern)
TN_AMIL  = 512
TK_AMIL  = 512

VMEM_LIMIT = 32 * 1024 * 1024   # raise at reference scale (see TODOs above)

BF16 = jnp.bfloat16
F32  = jnp.float32


# ------------------------------ kernel helpers --------------------------------
def _layernorm(x, g, b):
    mu = jnp.mean(x, axis=-1, keepdims=True)
    var = jnp.mean(jnp.square(x - mu), axis=-1, keepdims=True)
    return (x - mu) * lax.rsqrt(var + LN_EPS) * g + b


def _mha_fold(q, k, v, wo, mask):
    """Multi-head attention with the output projection folded into the head loop.

    q: (Rq, D) f32, k/v: (Rk, D) f32, wo: (D, D) bf16 value, mask: (Rq, Rk) or None.
    Returns (Rq, D) f32 = sum_h softmax(q_h k_h^T * scale + mask) v_h @ wo[h].
    No lane-axis concatenation; per-head results go straight through wo and
    accumulate (MRB-friendly on v7x).
    """
    acc = jnp.zeros((q.shape[0], D), F32)
    for h in range(H):
        sl = slice(h * DH, (h + 1) * DH)
        qh = (q[:, sl] * SCALE).astype(BF16)
        s = lax.dot_general(qh, k[:, sl].astype(BF16),
                            (((1,), (1,)), ((), ())),
                            preferred_element_type=F32)          # (Rq, Rk) f32
        if mask is not None:
            s = s + mask
        # explicit softmax; divide goes to the EUP approx-reciprocal slot
        m = jnp.max(s, axis=-1, keepdims=True)
        e = jnp.exp(s - m)
        p = e * pl.reciprocal(jnp.sum(e, axis=-1, keepdims=True), approx=True)
        ctx_h = jnp.dot(p.astype(BF16), v[:, sl].astype(BF16),
                        preferred_element_type=F32)              # (Rq, DH)
        acc = acc + jnp.dot(ctx_h.astype(BF16), wo[sl, :],
                            preferred_element_type=F32)          # (Rq, D)
    return acc


# ------------------------------ AMIL score kernel ------------------------------
def amil_kernel(feat_ref, wv_ref, bv_ref, ww_ref, bw_ref, out_ref, hid_acc):
    # grid = (n_tiles, k_tiles): n tiles the hidden dim, k tiles the contraction.
    # hidden = tanh(feat @ Wv + bv); score = sum(hidden * ww) + bw.
    # `hidden` never fully materializes: per n-tile we accumulate over k, then
    # fuse tanh + the ww reduction into the resident score output.
    n = pl.program_id(0)
    k = pl.program_id(1)

    @pl.when(jnp.logical_and(n == 0, k == 0))
    def _init():
        out_ref[...] = jnp.zeros_like(out_ref) + bw_ref[...]

    @pl.when(k == 0)
    def _reset():
        hid_acc[...] = jnp.zeros_like(hid_acc)

    hid_acc[...] += jnp.dot(feat_ref[...], wv_ref[...],
                            preferred_element_type=F32)

    @pl.when(k == pl.num_programs(1) - 1)
    def _finish():
        h = jnp.tanh(hid_acc[...] + bv_ref[...])
        out_ref[...] += jnp.sum(h * ww_ref[...], axis=-1, keepdims=True)


def amil_scores(feat_bf16, wv, bv, ww, bw):
    n_t = TD // TN_AMIL
    k_t = TD // TK_AMIL
    return pl.pallas_call(
        amil_kernel,
        out_shape=jax.ShapeDtypeStruct((B * N_INST, 1), F32),
        grid_spec=pltpu.PrefetchScalarGridSpec(
            num_scalar_prefetch=0,
            grid=(n_t, k_t),
            in_specs=[
                pl.BlockSpec((B * N_INST, TK_AMIL), lambda n, k: (0, k)),  # feat
                pl.BlockSpec((TK_AMIL, TN_AMIL),    lambda n, k: (k, n)),  # Wv
                pl.BlockSpec((1, TN_AMIL),          lambda n, k: (0, n)),  # bv
                pl.BlockSpec((1, TN_AMIL),          lambda n, k: (0, n)),  # ww
                pl.BlockSpec((1, 1),                lambda n, k: (0, 0)),  # bw
            ],
            out_specs=pl.BlockSpec((B * N_INST, 1), lambda n, k: (0, 0)),
            scratch_shapes=[pltpu.VMEM((B * N_INST, TN_AMIL), F32)],
        ),
        compiler_params=pltpu.CompilerParams(
            dimension_semantics=("arbitrary", "arbitrary"),
            vmem_limit_bytes=VMEM_LIMIT),
    )(feat_bf16, wv, bv, ww, bw)


# ------------------------------ fused main kernel -------------------------------
def fused_kernel(idx_ref,                                    # scalar prefetch (SMEM)
                 img_ref, qtok_ref,
                 ca_wq_ref, ca_bq_ref, ca_wkv_ref, ca_bkv_ref, ca_wo_ref, ca_bo_ref,
                 eeg_ref, eln_g_ref, eln_b_ref, eeg_w_ref, eeg_b_ref,
                 tok_ref, cls_tok_ref, cls_w_ref, cls_b_ref,
                 wqkv_ref, bqkv_ref, wo_ref, bo_ref, g1_ref, b1_ref,
                 w1_ref, fb1_ref, w2_ref, fb2_ref, g2_ref, b2_ref,
                 logits_ref, enc_ref,
                 x_scratch, mask_scratch, sel_scratch):
    l = pl.program_id(0)

    # -------- step 0: build mask + fused sequence + classifier head ------------
    @pl.when(l == 0)
    def _prologue():
        # block-diagonal + key-padding additive mask, built once and reused by
        # every layer / head (no per-layer iota/where work).
        row = lax.broadcasted_iota(jnp.int32, (R_ALL, R_ALL), 0)
        col = lax.broadcasted_iota(jnp.int32, (R_ALL, R_ALL), 1)
        mask = jnp.full((R_ALL, R_ALL), NEG_INF, F32)
        for b in range(B):
            r0 = b * L_PAD
            inside = ((row >= r0) & (row < r0 + L_PAD) &
                      (col >= r0) & (col < r0 + L_SEQ))
            mask = jnp.where(inside, 0.0, mask)
        mask_scratch[...] = mask

        # gather selected instances straight into VMEM scratch (no concatenate,
        # `selected` never materializes in HBM)
        for b in range(B):
            for kk in range(K_SEL):
                inst = idx_ref[b * K_SEL + kk]                # int32 scalar (SMEM)
                src = pl.multiple_of((b * N_INST + inst) * T_IMG, T_IMG)
                dst = (b * K_SEL + kk) * T_IMG
                sel_scratch[dst:dst + T_IMG, :] = img_ref[pl.ds(src, T_IMG), :]

        # cross-attention fusion: shared queries, fused K/V projection
        q = (jnp.dot(qtok_ref[...], ca_wq_ref[...],
                     preferred_element_type=F32) + ca_bq_ref[...])       # (Q_TOK, D)
        kv = (jnp.dot(sel_scratch[...], ca_wkv_ref[...],
                      preferred_element_type=F32) + ca_bkv_ref[...])     # (B*Q_TOK, 2D)
        ca_wo = ca_wo_ref[...]
        tok0 = tok_ref[0:1, :]
        cls_tok = cls_tok_ref[...]                            # (1, D)
        pad = jnp.zeros((L_PAD - L_SEQ, D), F32)

        # EEG path: LayerNorm -> Linear -> ReLU -> + token_type[1]
        xn = _layernorm(eeg_ref[...], eln_g_ref[...], eln_b_ref[...])
        eeg_emb = jnp.maximum(
            jnp.dot(xn.astype(BF16), eeg_w_ref[...],
                    preferred_element_type=F32) + eeg_b_ref[...], 0.0)
        eeg_emb = eeg_emb + tok_ref[1:2, :]                   # (B*S_EEG, D)

        for b in range(B):
            k_b = kv[b * Q_TOK:(b + 1) * Q_TOK, :D]
            v_b = kv[b * Q_TOK:(b + 1) * Q_TOK, D:]
            img_emb_b = (_mha_fold(q, k_b, v_b, ca_wo, None)
                         + ca_bo_ref[...] + tok0)             # (Q_TOK, D)

            # classifier head from images_embedding[:, 0, :] -- in the reference
            # this is the cross-attn output AFTER the token_type[0] add (the
            # tuple reassignment rebinds images_embedding); dropout = eval id.
            logits_ref[b:b + 1, :] = (
                jnp.dot(img_emb_b[0:1, :].astype(BF16), cls_w_ref[...],
                        preferred_element_type=F32) + cls_b_ref[...])

            # write [cls | img | eeg | pad] rows directly into the resident
            # activation scratch (pure addressing, no concat temporaries)
            r0 = b * L_PAD
            x_scratch[r0:r0 + 1, :] = cls_tok
            x_scratch[r0 + 1:r0 + 1 + Q_TOK, :] = img_emb_b
            x_scratch[r0 + 1 + Q_TOK:r0 + L_SEQ, :] = \
                eeg_emb[b * S_EEG:(b + 1) * S_EEG, :]
            x_scratch[r0 + L_SEQ:r0 + L_PAD, :] = pad

    # -------- every step: one transformer encoder layer (post-norm, ReLU FFN) --
    x = x_scratch[...]                                        # (R_ALL, D) f32
    qkv = (jnp.dot(x.astype(BF16), wqkv_ref[0],
                   preferred_element_type=F32) + bqkv_ref[0])             # fused QKV
    attn = (_mha_fold(qkv[:, :D], qkv[:, D:2 * D], qkv[:, 2 * D:],
                      wo_ref[0], mask_scratch[...])
            + bo_ref[0])
    h1 = _layernorm(x + attn, g1_ref[0], b1_ref[0])
    ff = jnp.maximum(jnp.dot(h1.astype(BF16), w1_ref[0],
                             preferred_element_type=F32) + fb1_ref[0], 0.0)
    ff = (jnp.dot(ff.astype(BF16), w2_ref[0],
                  preferred_element_type=F32) + fb2_ref[0])
    out = _layernorm(h1 + ff, g2_ref[0], b2_ref[0])
    x_scratch[...] = out

    @pl.when(l == pl.num_programs(0) - 1)
    def _epilogue():
        # reference forward discards the encoder output; emit it once, in bf16
        enc_ref[...] = out.astype(BF16)


def _const(shape):
    return pl.BlockSpec(shape, lambda l, idx: (0,) * len(shape))


def _layer(shape2):  # per-layer block of a [N_LAYERS, a, b] stacked parameter
    return pl.BlockSpec((1,) + shape2, lambda l, idx: (l, 0, 0))


def fused_forward(idx_flat, images_flat, eeg_flat, p):
    enc = p['enc']
    grid_spec = pltpu.PrefetchScalarGridSpec(
        num_scalar_prefetch=1,
        grid=(N_LAYERS,),
        in_specs=[
            _const((B * N_INST * T_IMG, D)),        # image features (bf16)
            _const((Q_TOK, D)),                     # query tokens (bf16)
            _const((D, D)), _const((1, D)),         # ca_wq, ca_bq
            _const((D, 2 * D)), _const((1, 2 * D)), # ca_wkv, ca_bkv
            _const((D, D)), _const((1, D)),         # ca_wo, ca_bo
            _const((B * S_EEG, E)),                 # eeg (f32)
            _const((1, E)), _const((1, E)),         # eeg LN gamma/beta
            _const((E, D)), _const((1, D)),         # eeg_w, eeg_b
            _const((2, D)),                         # token_type embeddings
            _const((1, D)),                         # cls_token
            _const((D, C_PAD)), _const((1, C_PAD)), # classifier w, b (lane-padded)
            _layer((D, 3 * D)), _layer((1, 3 * D)), # enc wqkv, bqkv
            _layer((D, D)), _layer((1, D)),         # enc wo, bo
            _layer((1, D)), _layer((1, D)),         # enc ln1 g, b
            _layer((D, FF)), _layer((1, FF)),       # enc w1, fb1
            _layer((FF, D)), _layer((1, D)),        # enc w2, fb2
            _layer((1, D)), _layer((1, D)),         # enc ln2 g, b
        ],
        out_specs=[
            pl.BlockSpec((B, C_PAD), lambda l, idx: (0, 0)),
            pl.BlockSpec((R_ALL, D), lambda l, idx: (0, 0)),
        ],
        scratch_shapes=[
            pltpu.VMEM((R_ALL, D), F32),            # resident activations
            pltpu.VMEM((R_ALL, R_ALL), F32),        # block-diag key mask
            pltpu.VMEM((B * Q_TOK, D), BF16),       # gathered selected instances
        ],
    )
    return pl.pallas_call(
        fused_kernel,
        out_shape=(jax.ShapeDtypeStruct((B, C_PAD), F32),
                   jax.ShapeDtypeStruct((R_ALL, D), BF16)),
        grid_spec=grid_spec,
        compiler_params=pltpu.CompilerParams(
            dimension_semantics=("arbitrary",),
            vmem_limit_bytes=VMEM_LIMIT),
    )(idx_flat, images_flat, p['query_tokens'],
      p['ca_wq'], p['ca_bq'], p['ca_wkv'], p['ca_bkv'], p['ca_wo'], p['ca_bo'],
      eeg_flat, p['eeg_ln_g'], p['eeg_ln_b'], p['eeg_w'], p['eeg_b'],
      p['tok_type'], p['cls_token'], p['cls_w'], p['cls_b'],
      enc['wqkv'], enc['bqkv'], enc['wo'], enc['bo'],
      enc['g1'], enc['b1'], enc['w1'], enc['fb1'],
      enc['w2'], enc['fb2'], enc['g2'], enc['b2'])


# ------------------------------ parameters ------------------------------------
def init_params(key):
    ks = iter(jax.random.split(key, 16))

    def nrm(shape, dtype=F32, std=0.02):
        return (std * jax.random.normal(next(ks), shape)).astype(dtype)

    zeros = lambda s: jnp.zeros(s, F32)
    ones = lambda s: jnp.ones(s, F32)

    # classifier weight lane-padded to C_PAD (extra columns zero, sliced off in
    # the wrapper) so the logits store is lane-dense.
    cls_core = 0.02 * jax.random.normal(next(ks), (D, C))
    cls_w = jnp.zeros((D, C_PAD), F32).at[:, :C].set(cls_core).astype(BF16)

    p = dict(
        # AMIL instance scoring
        att_V_w=nrm((TD, TD), BF16), att_V_b=zeros((1, TD)),
        att_w_w=nrm((1, TD)), att_w_b=zeros((1, 1)),
        # cross-attention fusion (fused K/V projection)
        query_tokens=nrm((Q_TOK, D), BF16),              # std=0.02 per reference
        ca_wq=nrm((D, D), BF16), ca_bq=zeros((1, D)),
        ca_wkv=nrm((D, 2 * D), BF16), ca_bkv=zeros((1, 2 * D)),
        ca_wo=nrm((D, D), BF16), ca_bo=zeros((1, D)),
        # EEG path
        eeg_ln_g=ones((1, E)), eeg_ln_b=zeros((1, E)),
        eeg_w=nrm((E, D), BF16), eeg_b=zeros((1, D)),
        # embeddings + head
        tok_type=nrm((2, D)),
        cls_token=zeros((1, D)),                         # zeros per reference
        cls_w=cls_w, cls_b=zeros((1, C_PAD)),
        # stacked encoder layers (fused QKV weight per layer)
        enc=dict(
            wqkv=nrm((N_LAYERS, D, 3 * D), BF16), bqkv=zeros((N_LAYERS, 1, 3 * D)),
            wo=nrm((N_LAYERS, D, D), BF16), bo=zeros((N_LAYERS, 1, D)),
            g1=ones((N_LAYERS, 1, D)), b1=zeros((N_LAYERS, 1, D)),
            w1=nrm((N_LAYERS, D, FF), BF16), fb1=zeros((N_LAYERS, 1, FF)),
            w2=nrm((N_LAYERS, FF, D), BF16), fb2=zeros((N_LAYERS, 1, D)),
            g2=ones((N_LAYERS, 1, D)), b2=zeros((N_LAYERS, 1, D)),
        ),
    )
    return p


# ------------------------------ forward pass -----------------------------------
def forward(params, eeg_data, images_embedding):
    img_bf16 = images_embedding.astype(BF16)

    # ---- instance selection: 'amil_topk' (softmax is monotonic -> top_k on raw
    #      scores yields identical indices to top_k on softmax(scores)) ----
    feat = img_bf16.reshape(B * N_INST, TD)
    scores = amil_scores(feat, params['att_V_w'], params['att_V_b'],
                         params['att_w_w'], params['att_w_b'])
    scores = scores.reshape(B, N_INST)
    _, idx = lax.top_k(scores, K_SEL)                        # (B, K_SEL) int32
    idx_flat = idx.reshape(B * K_SEL).astype(jnp.int32)

    # ---- everything else in one fused kernel ----
    logits_pad, enc_flat = fused_forward(
        idx_flat,
        img_bf16.reshape(B * N_INST * T_IMG, D),
        eeg_data.reshape(B * S_EEG, E).astype(F32),
        params)

    logits = logits_pad[:, :C]
    # encoder output is computed faithfully to the reference forward (which
    # discards it); strip the sublane padding before returning
    enc = enc_flat.reshape(B, L_PAD, D)[:, :L_SEQ, :].astype(F32)
    return logits, enc


# ---------------------------------- main ----------------------------------------
if __name__ == "__main__":
    key = jax.random.PRNGKey(0)
    pkey, k_eeg, k_img = jax.random.split(key, 3)
    params = init_params(pkey)

    eeg_data = jax.random.normal(k_eeg, (B, S_EEG, E), F32)
    images_embedding = jax.random.normal(k_img, (B, N_INST, T_IMG, D), F32)

    logits, enc_out = forward(params, eeg_data, images_embedding)
    jax.block_until_ready((logits, enc_out))

    assert logits.shape == (B, C)
    assert enc_out.shape == (B, L_SEQ, D)
    assert bool(jnp.all(jnp.isfinite(logits)))
    assert bool(jnp.all(jnp.isfinite(enc_out)))
    print("KERNEL_OK")
</pallas_src>

<mosaic_0001>
module attributes {stable_mosaic.version = 11 : i64} {
  func.func @amil_kernel(%arg0: i32, %arg1: i32, %arg2: memref<8x512xbf16, #tpu.memory_space<vmem>>, %arg3: memref<512x512xbf16, #tpu.memory_space<vmem>>, %arg4: memref<1x512xf32, #tpu.memory_space<vmem>>, %arg5: memref<1x512xf32, #tpu.memory_space<vmem>>, %arg6: memref<1x1xf32, #tpu.memory_space<vmem>>, %arg7: memref<8x1xf32, #tpu.memory_space<vmem>>, %arg8: memref<8x512xf32, #tpu.memory_space<vmem>>) attributes {dimension_semantics = [#tpu.dimension_semantics<arbitrary>, #tpu.dimension_semantics<arbitrary>], iteration_bounds = array<i64: 2, 2>, scalar_prefetch = 0 : i64, scratch_operands = 1 : i64, tpu.core_type = #tpu.core_type<tc>, window_params = [{transform_indices = @transform_0, window_bounds = array<i64: 8, 512>}, {transform_indices = @transform_1, window_bounds = array<i64: 512, 512>}, {transform_indices = @transform_2, window_bounds = array<i64: 1, 512>}, {transform_indices = @transform_3, window_bounds = array<i64: 1, 512>}, {pipeline_mode = #tpu.pipeline_mode<synchronous>, transform_indices = @transform_4, window_bounds = array<i64: 1, 1>}, {pipeline_mode = #tpu.pipeline_mode<synchronous>, transform_indices = @transform_5, window_bounds = array<i64: 8, 1>}]} {
    %c0_i32 = arith.constant 0 : i32
    %0 = arith.cmpi eq, %arg0, %c0_i32 : i32
    %c0_i32_0 = arith.constant 0 : i32
    %1 = arith.cmpi eq, %arg1, %c0_i32_0 : i32
    %2 = arith.andi %0, %1 : i1
    %3 = arith.extui %2 : i1 to i32
    %c0_i32_1 = arith.constant 0 : i32
    %4 = arith.cmpi ne, %3, %c0_i32_1 : i32
    scf.if %4 {
      %cst_12 = arith.constant 0.000000e+00 : f32
      %17 = vector.broadcast %cst_12 : f32 to vector<8x1xf32>
      %c0_13 = arith.constant 0 : index
      %c0_14 = arith.constant 0 : index
      %18 = vector.load %arg6[%c0_13, %c0_14] : memref<1x1xf32, #tpu.memory_space<vmem>>, vector<1x1xf32>
      %19 = vector.broadcast %18 : vector<1x1xf32> to vector<8x1xf32>
      %20 = arith.addf %17, %19 : vector<8x1xf32>
      %c0_15 = arith.constant 0 : index
      %c0_16 = arith.constant 0 : index
      %21 = vector.load %arg7[%c0_15, %c0_16] : memref<8x1xf32, #tpu.memory_space<vmem>>, vector<8x1xf32>
      tpu.vector_store %arg7[%c0_15, %c0_16], %20 {strides = array<i32>} : memref<8x1xf32, #tpu.memory_space<vmem>>, vector<8x1xf32>,
    } else {
    }
    %c0_i32_2 = arith.constant 0 : i32
    %5 = arith.cmpi eq, %arg1, %c0_i32_2 : i32
    %6 = arith.extui %5 : i1 to i32
    %c0_i32_3 = arith.constant 0 : i32
    %7 = arith.cmpi ne, %6, %c0_i32_3 : i32
    scf.if %7 {
      %cst_12 = arith.constant 0.000000e+00 : f32
      %17 = vector.broadcast %cst_12 : f32 to vector<8x512xf32>
      %c0_13 = arith.constant 0 : index
      %c0_14 = arith.constant 0 : index
      %18 = vector.load %arg8[%c0_13, %c0_14] : memref<8x512xf32, #tpu.memory_space<vmem>>, vector<8x512xf32>
      tpu.vector_store %arg8[%c0_13, %c0_14], %17 {strides = array<i32>} : memref<8x512xf32, #tpu.memory_space<vmem>>, vector<8x512xf32>,
    } else {
    }
    %c0 = arith.constant 0 : index
    %c0_4 = arith.constant 0 : index
    %8 = vector.load %arg8[%c0, %c0_4] : memref<8x512xf32, #tpu.memory_space<vmem>>, vector<8x512xf32>
    %c0_5 = arith.constant 0 : index
    %c0_6 = arith.constant 0 : index
    %9 = vector.load %arg2[%c0_5, %c0_6] : memref<8x512xbf16, #tpu.memory_space<vmem>>, vector<8x512xbf16>
    %c0_7 = arith.constant 0 : index
    %c0_8 = arith.constant 0 : index
    %10 = vector.load %arg3[%c0_7, %c0_8] : memref<512x512xbf16, #tpu.memory_space<vmem>>, vector<512x512xbf16>
    %cst = arith.constant dense<0.000000e+00> : vector<8x512xf32>
    %11 = tpu.matmul %9, %10, %cst {dimension_numbers = #tpu.dot_dimension_numbers<[1], [0], [0], [1], [0, 0, 1, 1], [], []>} : vector<8x512xbf16>, vector<512x512xbf16>, vector<8x512xf32> -> vector<8x512xf32>
    %12 = arith.addf %8, %11 : vector<8x512xf32>
    %c0_9 = arith.constant 0 : index
    %c0_10 = arith.constant 0 : index
    %13 = vector.load %arg8[%c0_9, %c0_10] : memref<8x512xf32, #tpu.memory_space<vmem>>, vector<8x512xf32>
    tpu.vector_store %arg8[%c0_9, %c0_10], %12 {strides = array<i32>} : memref<8x512xf32, #tpu.memory_space<vmem>>, vector<8x512xf32>,
    %c1_i32 = arith.constant 1 : i32
    %14 = arith.cmpi eq, %arg1, %c1_i32 : i32
    %15 = arith.extui %14 : i1 to i32
    %c0_i32_11 = arith.constant 0 : i32
    %16 = arith.cmpi ne, %15, %c0_i32_11 : i32
    scf.if %16 {
      %c0_12 = arith.constant 0 : index
      %c0_13 = arith.constant 0 : index
      %17 = vector.load %arg8[%c0_12, %c0_13] : memref<8x512xf32, #tpu.memory_space<vmem>>, vector<8x512xf32>
      %c0_14 = arith.constant 0 : index
      %c0_15 = arith.constant 0 : index
      %18 = vector.load %arg4[%c0_14, %c0_15] : memref<1x512xf32, #tpu.memory_space<vmem>>, vector<1x512xf32>
      %19 = vector.broadcast %18 : vector<1x512xf32> to vector<8x512xf32>
      %20 = arith.addf %17, %19 : vector<8x512xf32>
      %21 = math.tanh %20 : vector<8x512xf32>
      %c0_16 = arith.constant 0 : index
      %c0_17 = arith.constant 0 : index
      %22 = vector.load %arg7[%c0_16, %c0_17] : memref<8x1xf32, #tpu.memory_space<vmem>>, vector<8x1xf32>
      %c0_18 = arith.constant 0 : index
      %c0_19 = arith.constant 0 : index
      %23 = vector.load %arg5[%c0_18, %c0_19] : memref<1x512xf32, #tpu.memory_space<vmem>>, vector<1x512xf32>
      %24 = vector.broadcast %23 : vector<1x512xf32> to vector<8x512xf32>
      %25 = arith.mulf %21, %24 : vector<8x512xf32>
      %cst_20 = arith.constant dense<0.000000e+00> : vector<8xf32>
      %26 = vector.multi_reduction <add>, %25, %cst_20 [1] : vector<8x512xf32> to vector<8xf32>
      %27 = vector.shape_cast %26 : vector<8xf32> to vector<8x1xf32>
      %28 = arith.addf %22, %27 : vector<8x1xf32>
      %c0_21 = arith.constant 0 : index
      %c0_22 = arith.constant 0 : index
      %29 = vector.load %arg7[%c0_21, %c0_22] : memref<8x1xf32, #tpu.memory_space<vmem>>, vector<8x1xf32>
      tpu.vector_store %arg7[%c0_21, %c0_22], %28 {strides = array<i32>} : memref<8x1xf32, #tpu.memory_space<vmem>>, vector<8x1xf32>,
    } else {
    }
    return
  }
  func.func @transform_0(%arg0: i32, %arg1: i32) -> (i32, i32) {
    %c0_i32 = arith.constant 0 : i32
    %c0_i32_0 = arith.constant 0 : i32
    return %c0_i32, %arg1 : i32, i32
  }
  func.func @transform_1(%arg0: i32, %arg1: i32) -> (i32, i32) {
    %c0_i32 = arith.constant 0 : i32
    return %arg1, %arg0 : i32, i32
  }
  func.func @transform_2(%arg0: i32, %arg1: i32) -> (i32, i32) {
    %c0_i32 = arith.constant 0 : i32
    %c0_i32_0 = arith.constant 0 : i32
    return %c0_i32, %arg0 : i32, i32
  }
  func.func @transform_3(%arg0: i32, %arg1: i32) -> (i32, i32) {
    %c0_i32 = arith.constant 0 : i32
    %c0_i32_0 = arith.constant 0 : i32
    return %c0_i32, %arg0 : i32, i32
  }
  func.func @transform_4(%arg0: i32, %arg1: i32) -> (i32, i32) {
    %c0_i32 = arith.constant 0 : i32
    %c0_i32_0 = arith.constant 0 : i32
    %c0_i32_1 = arith.constant 0 : i32
    return %c0_i32, %c0_i32_0 : i32, i32
  }
  func.func @transform_5(%arg0: i32, %arg1: i32) -> (i32, i32) {
    %c0_i32 = arith.constant 0 : i32
    %c0_i32_0 = arith.constant 0 : i32
    %c0_i32_1 = arith.constant 0 : i32
    return %c0_i32, %c0_i32_0 : i32, i32
  }
}

</mosaic_0001>

<llo_original>
// kernel: tpu_custom_call.1
$region0: #{tpu_custom_call.1}
  #allocation0 [shape = 'u32[]', space=smem, size = 0x4, offset = 0x4, fixed_abs, tag = 'smem constant byte address 0x4 - core index']
  #allocation1 [shape = 'u32[144,128]{1,0:T(1,128)}', space=vmem, size = 0x12000, scoped, tag = 'internal scratch']
  #allocation2 [shape = 'f32[8,512]{1,0:T(8,128)}', space=vmem, size = 0x4000, scoped, tag = 'scratch operand']
  #allocation3 [shape = 'f32[1,1]{1,0:T(1,128)S(1)}', space=vmem, size = 0x200, scoped, tag = 'scoped memory for tpu_custom_call.1']
  %s0 = inlined_call_operand.hbm [shape: bf16[8,1024], index: 0, kind: input, shape index: {}]
  %s1 = inlined_call_operand.hbm [shape: bf16[1024,1024], index: 1, kind: input, shape index: {}]
  %s2 = inlined_call_operand.hbm [shape: f32[1,1024], index: 2, kind: input, shape index: {}]
  %s3 = inlined_call_operand.hbm [shape: f32[1,1024], index: 3, kind: input, shape index: {}]
  %s4 = inlined_call_operand.<no memory space> [shape: f32[1,1], index: 4, kind: input, shape index: {}]
  %s5 = inlined_call_operand.vmem [shape: f32[8,1], index: 5, kind: output, shape index: {}]
  %s6 = sld [smem:[#allocation0]]
  $region81: #{tpu_custom_call.1} parent=0
    _
  %s8 = ssub.s32 1, %s6
  %s9 = scalar_select 0, %s8, %s6
  %v10 = vstv %s4
  %11 = vst [vmem:[#allocation3] sm:$0x1] %v10
  $region1: #{tpu_custom_call.1} parent=0
    #allocation4 [shape = 'u8[16384]{0}', space=vmem, size = 0x4000, scoped, tag = 'input window, operand 0']
    #allocation5 [shape = 's32[2]{0}', space=sflag, size = 0x8, scoped, tag = 'scoped memory for tpu_custom_call.1']
    #allocation6 [shape = 'u8[1048576]{0}', space=vmem, size = 0x100000, scoped, tag = 'input window, operand 1']
    #allocation7 [shape = 's32[2]{0}', space=sflag, size = 0x8, scoped, tag = 'scoped memory for tpu_custom_call.1']
    #allocation8 [shape = 'u8[4096]{0}', space=vmem, size = 0x1000, scoped, tag = 'input window, operand 2']
    #allocation9 [shape = 'u8[4096]{0}', space=vmem, size = 0x1000, scoped, tag = 'input window, operand 3']
    #allocation10 [shape = 's32[2]{0}', space=sflag, size = 0x8, scoped, tag = 'scoped memory for tpu_custom_call.1']
    %12 = vsyncpa [#allocation5], 0
    %s13 = scalar_lea.sflag [#allocation5], 1
    %14 = vsyncpa %s13, 0
    %15 = vsyncpa [#allocation7], 0
    %s16 = scalar_lea.sflag [#allocation7], 1
    %17 = vsyncpa %s16, 0
    %18 = vsyncpa [#allocation10], 0
    %s19 = scalar_lea.sflag [#allocation10], 1
    %20 = vsyncpa %s19, 0
    loop: start=0, step=1, limit=6
    $region2: #{tpu_custom_call.1} parent=1 // loop_pre_header
      _
    $region3: #{tpu_custom_call.1} parent=1 // loop_header
      %s22 = sphi 0, %s26
      %p23 = scmp.ge.s32.totalorder %s22, 6
      %s29 = sphi 0, %s41
      %s30 = sphi 0, %s37
      %s31 = sphi 0, %s29
      %s32 = sphi 0, %s30
      %s33 = sphi 0, %s31
      %s34 = sphi 0, %s32
      %s44 = sphi 0, %s46
      %s47 = sphi 0, %s44
      %s48 = sphi 0, %s47
      %s64 = sphi 0, %s48
      %s72 = sphi 0, %s74
      %s75 = sphi 0, %s72
      %s76 = sphi 0, %s75
      %s92 = sphi 0, %s76
      %s98 = sphi 0, %s100
      %s101 = sphi 0, %s98
      %s102 = sphi 0, %s101
      %s118 = sphi 0, %s102
      %s124 = sphi 0, %s126
      %s127 = sphi 0, %s124
      %s128 = sphi 0, %s127
      %s144 = sphi 0, %s128
      %s148 = sphi 0, %s148
      %s150 = sphi 0, %s148
      %s151 = sphi 0, %s150
      %s165 = sphi 0, %s151
      %s169 = sphi 0, %s169
      %s171 = sphi 0, %s169
      %s172 = sphi 0, %s171
      %s186 = sphi 0, %s172
    $region4: #{tpu_custom_call.1} parent=1 // loop_header_branch
      %25 = sbr.rel (%p23) target = $region8
    $region5: #{tpu_custom_call.1} parent=1 // loop_body
      %s27 = ssub.s32 %s22, 1
      %s28 = ssub.s32 %s22, 2
      %s35 = sadd.s32 1, %s30
      %p36 = scmp.ge.s32.totalorder %s35, 2
      %s37 = scalar_select %p36, 0, %s35
      %s38 = sadd.s32 1, %s29
      %s39 = scalar_select %p36, %s38, %s29
      %p40 = scmp.ge.s32.totalorder %s39, 2
      %s41 = scalar_select %p40, 0, %s39
      %s42 = ssub.s32 %s30, %s37
      %p43 = scmp.eq.s32.totalorder %s42, 0
      %s45 = sadd.s32 %s44, 1
      %s46 = scalar_select %p43, %s44, %s45
      %p49 = pneg %p43
      %p50 = scmp.eq.s32.totalorder %s22, 3
      %p51 = por %p49, %p50
      %p52 = scmp.ne.s32.totalorder %s44, %s47
      %p53 = scmp.eq.s32.totalorder %s22, 0
      %p54 = por %p52, %p53
      %p55 = scmp.ne.s32.totalorder %s44, %s47
      %p56 = scmp.eq.s32.totalorder %s27, 3
      %p57 = por %p55, %p56
      %p58 = scmp.ne.s32.totalorder %s47, %s48
      %p59 = scmp.eq.s32.totalorder %s27, 0
      %p60 = por %p58, %p59
      %p61 = scmp.ne.s32.totalorder %s47, %s48
      %p62 = scmp.eq.s32.totalorder %s28, 3
      %p63 = por %p61, %p62
      %p65 = scmp.ne.s32.totalorder %s48, %s64
      %p66 = scmp.eq.s32.totalorder %s28, 0
      %p67 = por %p65, %p66
      %s68 = ssub.s32 %s30, %s37
      %s69 = ssub.s32 %s29, %s41
      %s70 = sor.u32 %s68, %s69
      %p71 = scmp.eq.s32.totalorder %s70, 0
      %s73 = sadd.s32 %s72, 1
      %s74 = scalar_select %p71, %s72, %s73
      %p77 = pneg %p71
      %p78 = scmp.eq.s32.totalorder %s22, 3
      %p79 = por %p77, %p78
      %p80 = scmp.ne.s32.totalorder %s72, %s75
      %p81 = scmp.eq.s32.totalorder %s22, 0
      %p82 = por %p80, %p81
      %p83 = scmp.ne.s32.totalorder %s72, %s75
      %p84 = scmp.eq.s32.totalorder %s27, 3
      %p85 = por %p83, %p84
      %p86 = scmp.ne.s32.totalorder %s75, %s76
      %p87 = scmp.eq.s32.totalorder %s27, 0
      %p88 = por %p86, %p87
      %p89 = scmp.ne.s32.totalorder %s75, %s76
      %p90 = scmp.eq.s32.totalorder %s28, 3
      %p91 = por %p89, %p90
      %p93 = scmp.ne.s32.totalorder %s76, %s92
      %p94 = scmp.eq.s32.totalorder %s28, 0
      %p95 = por %p93, %p94
      %s96 = ssub.s32 %s29, %s41
      %p97 = scmp.eq.s32.totalorder %s96, 0
      %s99 = sadd.s32 %s98, 1
      %s100 = scalar_select %p97, %s98, %s99
      %p103 = pneg %p97
      %p104 = scmp.eq.s32.totalorder %s22, 3
      %p105 = por %p103, %p104
      %p106 = scmp.ne.s32.totalorder %s98, %s101
      %p107 = scmp.eq.s32.totalorder %s22, 0
      %p108 = por %p106, %p107
      %p109 = scmp.ne.s32.totalorder %s98, %s101
      %p110 = scmp.eq.s32.totalorder %s27, 3
      %p111 = por %p109, %p110
      %p112 = scmp.ne.s32.totalorder %s101, %s102
      %p113 = scmp.eq.s32.totalorder %s27, 0
      %p114 = por %p112, %p113
      %p115 = scmp.ne.s32.totalorder %s101, %s102
      %p116 = scmp.eq.s32.totalorder %s28, 3
      %p117 = por %p115, %p116
      %p119 = scmp.ne.s32.totalorder %s102, %s118
      %p120 = scmp.eq.s32.totalorder %s28, 0
      %p121 = por %p119, %p120
      %s122 = ssub.s32 %s29, %s41
      %p123 = scmp.eq.s32.totalorder %s122, 0
      %s125 = sadd.s32 %s124, 1
      %s126 = scalar_select %p123, %s124, %s125
      %p129 = pneg %p123
      %p130 = scmp.eq.s32.totalorder %s22, 3
      %p131 = por %p129, %p130
      %p132 = scmp.ne.s32.totalorder %s124, %s127
      %p133 = scmp.eq.s32.totalorder %s22, 0
      %p134 = por %p132, %p133
      %p135 = scmp.ne.s32.totalorder %s124, %s127
      %p136 = scmp.eq.s32.totalorder %s27, 3
      %p137 = por %p135, %p136
      %p138 = scmp.ne.s32.totalorder %s127, %s128
      %p139 = scmp.eq.s32.totalorder %s27, 0
      %p140 = por %p138, %p139
      %p141 = scmp.ne.s32.totalorder %s127, %s128
      %p142 = scmp.eq.s32.totalorder %s28, 3
      %p143 = por %p141, %p142
      %p145 = scmp.ne.s32.totalorder %s128, %s144
      %p146 = scmp.eq.s32.totalorder %s28, 0
      %p147 = por %p145, %p146
      %s149 = sadd.s32 %s148, 1
      %p152 = scmp.eq.s32.totalorder %s22, 3
      %p153 = scmp.ne.s32.totalorder %s148, %s150
      %p154 = scmp.eq.s32.totalorder %s22, 0
      %p155 = por %p153, %p154
      %p156 = scmp.ne.s32.totalorder %s148, %s150
      %p157 = scmp.eq.s32.totalorder %s27, 3
      %p158 = por %p156, %p157
      %p159 = scmp.ne.s32.totalorder %s150, %s151
      %p160 = scmp.eq.s32.totalorder %s27, 0
      %p161 = por %p159, %p160
      %p162 = scmp.ne.s32.totalorder %s150, %s151
      %p163 = scmp.eq.s32.totalorder %s28, 3
      %p164 = por %p162, %p163
      %p166 = scmp.ne.s32.totalorder %s151, %s165
      %p167 = scmp.eq.s32.totalorder %s28, 0
      %p168 = por %p166, %p167
      %s170 = sadd.s32 %s169, 1
      %p173 = scmp.eq.s32.totalorder %s22, 3
      %p174 = scmp.ne.s32.totalorder %s169, %s171
      %p175 = scmp.eq.s32.totalorder %s22, 0
      %p176 = por %p174, %p175
      %p177 = scmp.ne.s32.totalorder %s169, %s171
      %p178 = scmp.eq.s32.totalorder %s27, 3
      %p179 = por %p177, %p178
      %p180 = scmp.ne.s32.totalorder %s171, %s172
      %p181 = scmp.eq.s32.totalorder %s27, 0
      %p182 = por %p180, %p181
      %p183 = scmp.ne.s32.totalorder %s171, %s172
      %p184 = scmp.eq.s32.totalorder %s28, 3
      %p185 = por %p183, %p184
      %p187 = scmp.ne.s32.totalorder %s172, %s186
      %p188 = scmp.eq.s32.totalorder %s28, 0
      %p189 = por %p187, %p188
      %p190 = scmp.le.s32.totalorder 1, %s22
      %p191 = scmp.lt.s32.totalorder %s22, 5
      %p192 = pnand %p190, %p191
      %p193 = pneg %p192
      // Predicated region
      $region9: #{tpu_custom_call.1} parent=5 // pred_check
        _
      $region10: #{tpu_custom_call.1} parent=5 // pred_check_branch
        %195 = sbr.rel (%p192) target = $region12
      $region11: #{tpu_custom_call.1} parent=5 // pred_region
        %s196 = ssub.s32 %s22, 1
        // Predicated region
        $region13: #{tpu_custom_call.1} parent=11 // pred_check
          %p197 = pneg %p161
        $region14: #{tpu_custom_call.1} parent=11 // pred_check_branch
          %199 = sbr.rel (%p197) target = $region16
        $region15: #{tpu_custom_call.1} parent=11 // pred_region
          _
        $region16: #{tpu_custom_call.1} parent=11 // pred_fallthru
          _
      $region12: #{tpu_custom_call.1} parent=5 // pred_fallthru
        _
      %p200 = scmp.lt.s32.totalorder %s22, 4
      // Predicated region
      $region17: #{tpu_custom_call.1} parent=5 // pred_check
        %p201 = pneg %p200
      $region18: #{tpu_custom_call.1} parent=5 // pred_check_branch
        %203 = sbr.rel (%p201) target = $region20
      $region19: #{tpu_custom_call.1} parent=5 // pred_region
        // Predicated region
        $region21: #{tpu_custom_call.1} parent=19 // pred_check
          %p204 = pneg %p54
        $region22: #{tpu_custom_call.1} parent=19 // pred_check_branch
          %206 = sbr.rel (%p204) target = $region24
        $region23: #{tpu_custom_call.1} parent=19 // pred_region
          %s207 = sand.u32 %s44, 1
          %s208 = scalar_lea.sflag [#allocation5], %s207
          %s209 = sand.u32 %s44, 1
          %s210 = smul.addr %s209, 16
          %s211 = scalar_lea.vmem [#allocation4], %s210
          %s212 = smul.u32 4, %s30
          %s214 = ssub.s32 256, 256
          %215 = vsyncadd %s208, %s214
          %s216 = smul.addr %s212, 64
          %s217 = scalar_lea.hbm %s0, %s216
          %s219 = sshll.u32 %s211, 4
          %s220 = int_to_ptr.vmem [resolvable:$true] %s219
          %222 = dma.hbm_to_vmem [thread:$0]  %s217, 256, %s220, %s208
        $region24: #{tpu_custom_call.1} parent=19 // pred_fallthru
          _
        // Predicated region
        $region25: #{tpu_custom_call.1} parent=19 // pred_check
          %p223 = pneg %p82
        $region26: #{tpu_custom_call.1} parent=19 // pred_check_branch
          %225 = sbr.rel (%p223) target = $region28
        $region27: #{tpu_custom_call.1} parent=19 // pred_region
          %s226 = sand.u32 %s22, 1
          %s227 = scalar_lea.sflag [#allocation7], %s226
          %s228 = sand.u32 %s72, 1
          %s229 = smul.addr %s228, 1024
          %s230 = scalar_lea.vmem [#allocation6], %s229
          %s231 = smul.u32 64, %s30
          %s232 = smul.u32 4, %s29
          %s234 = ssub.s32 16384, 16384
          %235 = vsyncadd %s227, %s234
          %s236 = smul.addr %s231, 8
          %s237 = sadd.s32 %s232, %s236
          %s238 = smul.addr %s237, 64
          %s239 = scalar_lea.hbm %s1, %s238
          %s240 = sshll.u32 %s230, 4
          %s241 = int_to_ptr.vmem [resolvable:$true] %s240
          %246 = dma.hbm_to_vmem [thread:$0]  %s239, 16384, %s241, %s227, 512, 256, 16
        $region28: #{tpu_custom_call.1} parent=19 // pred_fallthru
          _
        // Predicated region
        $region29: #{tpu_custom_call.1} parent=19 // pred_check
          %p247 = pneg %p108
        $region30: #{tpu_custom_call.1} parent=19 // pred_check_branch
          %249 = sbr.rel (%p247) target = $region32
        $region31: #{tpu_custom_call.1} parent=19 // pred_region
          %s250 = sand.u32 %s22, 1
          %s251 = scalar_lea.sflag [#allocation7], %s250
          %s252 = sand.u32 %s98, 1
          %s253 = smul.addr %s252, 4
          %s254 = scalar_lea.vmem [#allocation8], %s253
          %s255 = smul.u32 4, %s29
          %s257 = ssub.s32 64, 64
          %258 = vsyncadd %s251, %s257
          %s259 = smul.addr %s255, 16
          %s260 = scalar_lea.hbm %s2, %s259
          %s262 = sshll.u32 %s254, 4
          %s263 = int_to_ptr.vmem [resolvable:$true] %s262
          %265 = dma.hbm_to_vmem [thread:$0]  %s260, 64, %s263, %s251
        $region32: #{tpu_custom_call.1} parent=19 // pred_fallthru
          _
        // Predicated region
        $region33: #{tpu_custom_call.1} parent=19 // pred_check
          %p266 = pneg %p134
        $region34: #{tpu_custom_call.1} parent=19 // pred_check_branch
          %268 = sbr.rel (%p266) target = $region36
        $region35: #{tpu_custom_call.1} parent=19 // pred_region
          %s269 = sand.u32 %s124, 1
          %s270 = scalar_lea.sflag [#allocation10], %s269
          %s271 = sand.u32 %s124, 1
          %s272 = smul.addr %s271, 4
          %s273 = scalar_lea.vmem [#allocation9], %s272
          %s274 = smul.u32 4, %s29
          %s276 = ssub.s32 64, 64
          %277 = vsyncadd %s270, %s276
          %s278 = smul.addr %s274, 16
          %s279 = scalar_lea.hbm %s3, %s278
          %s281 = sshll.u32 %s273, 4
          %s282 = int_to_ptr.vmem [resolvable:$true] %s281
          %284 = dma.hbm_to_vmem [thread:$0]  %s279, 64, %s282, %s270
        $region36: #{tpu_custom_call.1} parent=19 // pred_fallthru
          _
      $region20: #{tpu_custom_call.1} parent=5 // pred_fallthru
        _
      %p285 = scmp.le.s32.totalorder 1, %s22
      %p286 = scmp.lt.s32.totalorder %s22, 5
      %p287 = pnand %p285, %p286
      %p288 = pneg %p287
      // Predicated region
      $region37: #{tpu_custom_call.1} parent=5 // pred_check
        _
      $region38: #{tpu_custom_call.1} parent=5 // pred_check_branch
        %290 = sbr.rel (%p287) target = $region40
      $region39: #{tpu_custom_call.1} parent=5 // pred_region
        %s291 = ssub.s32 %s22, 1
        %s292 = sand.u32 %s47, 1
        %s293 = scalar_lea.sflag [#allocation5], %s292
        %s294 = sand.u32 %s47, 1
        %s295 = smul.addr %s294, 16
        %s296 = scalar_lea.vmem [#allocation4], %s295
        // Predicated region
        $region41: #{tpu_custom_call.1} parent=39 // pred_check
          %p297 = pneg %p60
        $region42: #{tpu_custom_call.1} parent=39 // pred_check_branch
          %299 = sbr.rel (%p297) target = $region44
        $region43: #{tpu_custom_call.1} parent=39 // pred_region
          %300 = dma.done %s293, 256
        $region44: #{tpu_custom_call.1} parent=39 // pred_fallthru
          _
        %s301 = sand.u32 %s27, 1
        %s302 = scalar_lea.sflag [#allocation7], %s301
        %s303 = sand.u32 %s75, 1
        %s304 = smul.addr %s303, 1024
        %s305 = scalar_lea.vmem [#allocation6], %s304
        // Predicated region
        $region45: #{tpu_custom_call.1} parent=39 // pred_check
          %p306 = pneg %p88
        $region46: #{tpu_custom_call.1} parent=39 // pred_check_branch
          %308 = sbr.rel (%p306) target = $region48
        $region47: #{tpu_custom_call.1} parent=39 // pred_region
          %309 = dma.done %s302, 16384
        $region48: #{tpu_custom_call.1} parent=39 // pred_fallthru
          _
        %s310 = sand.u32 %s27, 1
        %s311 = scalar_lea.sflag [#allocation7], %s310
        %s312 = sand.u32 %s101, 1
        %s313 = smul.addr %s312, 4
        %s314 = scalar_lea.vmem [#allocation8], %s313
        // Predicated region
        $region49: #{tpu_custom_call.1} parent=39 // pred_check
          %p315 = pneg %p114
        $region50: #{tpu_custom_call.1} parent=39 // pred_check_branch
          %317 = sbr.rel (%p315) target = $region52
        $region51: #{tpu_custom_call.1} parent=39 // pred_region
          %318 = dma.done %s311, 64
        $region52: #{tpu_custom_call.1} parent=39 // pred_fallthru
          _
        %s319 = sand.u32 %s127, 1
        %s320 = scalar_lea.sflag [#allocation10], %s319
        %s321 = sand.u32 %s127, 1
        %s322 = smul.addr %s321, 4
        %s323 = scalar_lea.vmem [#allocation9], %s322
        // Predicated region
        $region53: #{tpu_custom_call.1} parent=39 // pred_check
          %p324 = pneg %p140
        $region54: #{tpu_custom_call.1} parent=39 // pred_check_branch
          %326 = sbr.rel (%p324) target = $region56
        $region55: #{tpu_custom_call.1} parent=39 // pred_region
          %327 = dma.done %s320, 64
        $region56: #{tpu_custom_call.1} parent=39 // pred_fallthru
          _
        %s328 = sand.u32 %s47, 1
        %s329 = scalar_lea.sflag [#allocation5], %s328
        %s330 = sand.u32 %s47, 1
        %s331 = smul.addr %s330, 16
        %s332 = scalar_lea.vmem [#allocation4], %s331
        %p333 = pneg %p60
        %p334 = pneg %p57
        %s335 = sand.u32 %s27, 1
        %s336 = scalar_lea.sflag [#allocation7], %s335
        %s337 = sand.u32 %s75, 1
        %s338 = smul.addr %s337, 1024
        %s339 = scalar_lea.vmem [#allocation6], %s338
        %p340 = pneg %p88
        %p341 = pneg %p85
        %s342 = sand.u32 %s27, 1
        %s343 = scalar_lea.sflag [#allocation7], %s342
        %s344 = sand.u32 %s101, 1
        %s345 = smul.addr %s344, 4
        %s346 = scalar_lea.vmem [#allocation8], %s345
        %p347 = pneg %p114
        %p348 = pneg %p111
        %s349 = sand.u32 %s127, 1
        %s350 = scalar_lea.sflag [#allocation10], %s349
        %s351 = sand.u32 %s127, 1
        %s352 = smul.addr %s351, 4
        %s353 = scalar_lea.vmem [#allocation9], %s352
        %p354 = pneg %p140
        %p355 = pneg %p137
        %p356 = pneg %p161
        %p357 = pneg %p158
        %p358 = pneg %p182
        %p359 = pneg %p179
        %s360 = smul.u32 4, %s32
        %s361 = smul.u32 64, %s32
        %s362 = smul.u32 4, %s31
        %s363 = smul.u32 4, %s31
        %s364 = smul.u32 4, %s31
        %p365 = scmp.eq.s32.totalorder %s31, 0
        %p366 = scmp.eq.s32.totalorder %s32, 0
        %p367 = pnand %p365, %p366
        %p368 = pneg %p367
        // Predicated region
        $region57: #{tpu_custom_call.1} parent=39 // pred_check
          _
        $region58: #{tpu_custom_call.1} parent=39 // pred_check_branch
          %370 = sbr.rel (%p367) target = $region60
        $region59: #{tpu_custom_call.1} parent=39 // pred_region
          %v371 = vld [vmem:[#allocation3] sm:$0x1]
          %v373 = vlaneseq
          %v374 = vshrl.u32 %v373, 7
          %v375 = vsub.s32 0, %v374
          %v376 = vrot.slane %v371, %v375
          %v378 = vadd.f32 %v376, 0.0
          %vm379 = vcmask 7168
          %380 = vst.msk [vmem:[%s5] sm:$0xff] %vm379, %v378
        $region60: #{tpu_custom_call.1} parent=39 // pred_fallthru
          _
        // Predicated region
        $region61: #{tpu_custom_call.1} parent=39 // pred_check
          %p381 = pneg %p366
        $region62: #{tpu_custom_call.1} parent=39 // pred_check_branch
          %383 = sbr.rel (%p381) target = $region64
        $region63: #{tpu_custom_call.1} parent=39 // pred_region
          %384 = vst [vmem:[#allocation2] sm:$0xff] 0.0
          %385 = vst [vmem:[#allocation2 + $0x8] sm:$0xff] 0.0
          %386 = vst [vmem:[#allocation2 + $0x10] sm:$0xff] 0.0
          %387 = vst [vmem:[#allocation2 + $0x18] sm:$0xff] 0.0
        $region64: #{tpu_custom_call.1} parent=39 // pred_fallthru
          _
        %v388 = vld [vmem:[#allocation2] sm:$0xff]
        %v389 = vld [vmem:[#allocation2 + $0x8] sm:$0xff]
        %v390 = vld [vmem:[#allocation2 + $0x10] sm:$0xff]
        %v391 = vld [vmem:[#allocation2 + $0x18] sm:$0xff]
        %v392 = vld [vmem:[%s296] sm:$0xff]
        %v393 = vld [vmem:[%s296 + $0x8] sm:$0xff]
        %v394 = vld [vmem:[%s305] sm:$0xff]
        %v395 = vld [vmem:[%s305 + $0x8] sm:$0xff]
        %v396 = vld [vmem:[%s305 + $0x10] sm:$0xff]
        %v397 = vld [vmem:[%s305 + $0x18] sm:$0xff]
        %v398 = vld [vmem:[%s305 + $0x20] sm:$0xff]
        %v399 = vld [vmem:[%s305 + $0x28] sm:$0xff]
        %v400 = vld [vmem:[%s305 + $0x30] sm:$0xff]
        %v401 = vld [vmem:[%s305 + $0x38] sm:$0xff]
        %v402 = vld [vmem:[%s305 + $0x40] sm:$0xff]
        %v403 = vld [vmem:[%s305 + $0x48] sm:$0xff]
        %v404 = vld [vmem:[%s305 + $0x50] sm:$0xff]
        %v405 = vld [vmem:[%s305 + $0x58] sm:$0xff]
        %v406 = vld [vmem:[%s305 + $0x60] sm:$0xff]
        %v407 = vld [vmem:[%s305 + $0x68] sm:$0xff]
        %v408 = vld [vmem:[%s305 + $0x70] sm:$0xff]
        %v409 = vld [vmem:[%s305 + $0x78] sm:$0xff]
        %v410 = vld [vmem:[%s305 + $0x80] sm:$0xff]
        %v411 = vld [vmem:[%s305 + $0x88] sm:$0xff]
        %v412 = vld [vmem:[%s305 + $0x90] sm:$0xff]
        %v413 = vld [vmem:[%s305 + $0x98] sm:$0xff]
        %v414 = vld [vmem:[%s305 + $0xa0] sm:$0xff]
        %v415 = vld [vmem:[%s305 + $0xa8] sm:$0xff]
        %v416 = vld [vmem:[%s305 + $0xb0] sm:$0xff]
        %v417 = vld [vmem:[%s305 + $0xb8] sm:$0xff]
        %v418 = vld [vmem:[%s305 + $0xc0] sm:$0xff]
        %v419 = vld [vmem:[%s305 + $0xc8] sm:$0xff]
        %v420 = vld [vmem:[%s305 + $0xd0] sm:$0xff]
        %v421 = vld [vmem:[%s305 + $0xd8] sm:$0xff]
        %v422 = vld [vmem:[%s305 + $0xe0] sm:$0xff]
        %v423 = vld [vmem:[%s305 + $0xe8] sm:$0xff]
        %v424 = vld [vmem:[%s305 + $0xf0] sm:$0xff]
        %v425 = vld [vmem:[%s305 + $0xf8] sm:$0xff]
        %v426 = vld [vmem:[%s305 + $0x100] sm:$0xff]
        %v427 = vld [vmem:[%s305 + $0x108] sm:$0xff]
        %v428 = vld [vmem:[%s305 + $0x110] sm:$0xff]
        %v429 = vld [vmem:[%s305 + $0x118] sm:$0xff]
        %v430 = vld [vmem:[%s305 + $0x120] sm:$0xff]
        %v431 = vld [vmem:[%s305 + $0x128] sm:$0xff]
        %v432 = vld [vmem:[%s305 + $0x130] sm:$0xff]
        %v433 = vld [vmem:[%s305 + $0x138] sm:$0xff]
        %v434 = vld [vmem:[%s305 + $0x140] sm:$0xff]
        %v435 = vld [vmem:[%s305 + $0x148] sm:$0xff]
        %v436 = vld [vmem:[%s305 + $0x150] sm:$0xff]
        %v437 = vld [vmem:[%s305 + $0x158] sm:$0xff]
        %v438 = vld [vmem:[%s305 + $0x160] sm:$0xff]
        %v439 = vld [vmem:[%s305 + $0x168] sm:$0xff]
        %v440 = vld [vmem:[%s305 + $0x170] sm:$0xff]
        %v441 = vld [vmem:[%s305 + $0x178] sm:$0xff]
        %v442 = vld [vmem:[%s305 + $0x180] sm:$0xff]
        %v443 = vld [vmem:[%s305 + $0x188] sm:$0xff]
        %v444 = vld [vmem:[%s305 + $0x190] sm:$0xff]
        %v445 = vld [vmem:[%s305 + $0x198] sm:$0xff]
        %v446 = vld [vmem:[%s305 + $0x1a0] sm:$0xff]
        %v447 = vld [vmem:[%s305 + $0x1a8] sm:$0xff]
        %v448 = vld [vmem:[%s305 + $0x1b0] sm:$0xff]
        %v449 = vld [vmem:[%s305 + $0x1b8] sm:$0xff]
        %v450 = vld [vmem:[%s305 + $0x1c0] sm:$0xff]
        %v451 = vld [vmem:[%s305 + $0x1c8] sm:$0xff]
        %v452 = vld [vmem:[%s305 + $0x1d0] sm:$0xff]
        %v453 = vld [vmem:[%s305 + $0x1d8] sm:$0xff]
        %v454 = vld [vmem:[%s305 + $0x1e0] sm:$0xff]
        %v455 = vld [vmem:[%s305 + $0x1e8] sm:$0xff]
        %v456 = vld [vmem:[%s305 + $0x1f0] sm:$0xff]
        %v457 = vld [vmem:[%s305 + $0x1f8] sm:$0xff]
        %v458 = vld [vmem:[%s305 + $0x200] sm:$0xff]
        %v459 = vld [vmem:[%s305 + $0x208] sm:$0xff]
        %v460 = vld [vmem:[%s305 + $0x210] sm:$0xff]
        %v461 = vld [vmem:[%s305 + $0x218] sm:$0xff]
        %v462 = vld [vmem:[%s305 + $0x220] sm:$0xff]
        %v463 = vld [vmem:[%s305 + $0x228] sm:$0xff]
        %v464 = vld [vmem:[%s305 + $0x230] sm:$0xff]
        %v465 = vld [vmem:[%s305 + $0x238] sm:$0xff]
        %v466 = vld [vmem:[%s305 + $0x240] sm:$0xff]
        %v467 = vld [vmem:[%s305 + $0x248] sm:$0xff]
        %v468 = vld [vmem:[%s305 + $0x250] sm:$0xff]
        %v469 = vld [vmem:[%s305 + $0x258] sm:$0xff]
        %v470 = vld [vmem:[%s305 + $0x260] sm:$0xff]
        %v471 = vld [vmem:[%s305 + $0x268] sm:$0xff]
        %v472 = vld [vmem:[%s305 + $0x270] sm:$0xff]
        %v473 = vld [vmem:[%s305 + $0x278] sm:$0xff]
        %v474 = vld [vmem:[%s305 + $0x280] sm:$0xff]
        %v475 = vld [vmem:[%s305 + $0x288] sm:$0xff]
        %v476 = vld [vmem:[%s305 + $0x290] sm:$0xff]
        %v477 = vld [vmem:[%s305 + $0x298] sm:$0xff]
        %v478 = vld [vmem:[%s305 + $0x2a0] sm:$0xff]
        %v479 = vld [vmem:[%s305 + $0x2a8] sm:$0xff]
        %v480 = vld [vmem:[%s305 + $0x2b0] sm:$0xff]
        %v481 = vld [vmem:[%s305 + $0x2b8] sm:$0xff]
        %v482 = vld [vmem:[%s305 + $0x2c0] sm:$0xff]
        %v483 = vld [vmem:[%s305 + $0x2c8] sm:$0xff]
        %v484 = vld [vmem:[%s305 + $0x2d0] sm:$0xff]
        %v485 = vld [vmem:[%s305 + $0x2d8] sm:$0xff]
        %v486 = vld [vmem:[%s305 + $0x2e0] sm:$0xff]
        %v487 = vld [vmem:[%s305 + $0x2e8] sm:$0xff]
        %v488 = vld [vmem:[%s305 + $0x2f0] sm:$0xff]
        %v489 = vld [vmem:[%s305 + $0x2f8] sm:$0xff]
        %v490 = vld [vmem:[%s305 + $0x300] sm:$0xff]
        %v491 = vld [vmem:[%s305 + $0x308] sm:$0xff]
        %v492 = vld [vmem:[%s305 + $0x310] sm:$0xff]
        %v493 = vld [vmem:[%s305 + $0x318] sm:$0xff]
        %v494 = vld [vmem:[%s305 + $0x320] sm:$0xff]
        %v495 = vld [vmem:[%s305 + $0x328] sm:$0xff]
        %v496 = vld [vmem:[%s305 + $0x330] sm:$0xff]
        %v497 = vld [vmem:[%s305 + $0x338] sm:$0xff]
        %v498 = vld [vmem:[%s305 + $0x340] sm:$0xff]
        %v499 = vld [vmem:[%s305 + $0x348] sm:$0xff]
        %v500 = vld [vmem:[%s305 + $0x350] sm:$0xff]
        %v501 = vld [vmem:[%s305 + $0x358] sm:$0xff]
        %v502 = vld [vmem:[%s305 + $0x360] sm:$0xff]
        %v503 = vld [vmem:[%s305 + $0x368] sm:$0xff]
        %v504 = vld [vmem:[%s305 + $0x370] sm:$0xff]
        %v505 = vld [vmem:[%s305 + $0x378] sm:$0xff]
        %v506 = vld [vmem:[%s305 + $0x380] sm:$0xff]
        %v507 = vld [vmem:[%s305 + $0x388] sm:$0xff]
        %v508 = vld [vmem:[%s305 + $0x390] sm:$0xff]
        %v509 = vld [vmem:[%s305 + $0x398] sm:$0xff]
        %v510 = vld [vmem:[%s305 + $0x3a0] sm:$0xff]
        %v511 = vld [vmem:[%s305 + $0x3a8] sm:$0xff]
        %v512 = vld [vmem:[%s305 + $0x3b0] sm:$0xff]
        %v513 = vld [vmem:[%s305 + $0x3b8] sm:$0xff]
        %v514 = vld [vmem:[%s305 + $0x3c0] sm:$0xff]
        %v515 = vld [vmem:[%s305 + $0x3c8] sm:$0xff]
        %v516 = vld [vmem:[%s305 + $0x3d0] sm:$0xff]
        %v517 = vld [vmem:[%s305 + $0x3d8] sm:$0xff]
        %v518 = vld [vmem:[%s305 + $0x3e0] sm:$0xff]
        %v519 = vld [vmem:[%s305 + $0x3e8] sm:$0xff]
        %v520 = vld [vmem:[%s305 + $0x3f0] sm:$0xff]
        %v521 = vld [vmem:[%s305 + $0x3f8] sm:$0xff]
        %v524 = vunpack.c.l.b16 %v392
        %v525 = vunpack.c.h.b16 %v392
        %v526 = vunpack.c.l.b16 %v393
        %v527 = vunpack.c.h.b16 %v393
        %v528 = vpack.c.b16 %v524, %v524
        %v529 = vpack.c.b16 %v525, %v525
        %v530 = vpack.c.b16 %v526, %v526
        %v531 = vpack.c.b16 %v527, %v527
        %v664 = vunpack.c.l.b16 %v394
        %v665 = vunpack.c.h.b16 %v394
        %v666 = vunpack.c.l.b16 %v395
        %v667 = vunpack.c.h.b16 %v395
        %v668 = vunpack.c.l.b16 %v396
        %v669 = vunpack.c.h.b16 %v396
        %v670 = vunpack.c.l.b16 %v397
        %v671 = vunpack.c.h.b16 %v397
        %v672 = vunpack.c.l.b16 %v398
        %v673 = vunpack.c.h.b16 %v398
        %v674 = vunpack.c.l.b16 %v399
        %v675 = vunpack.c.h.b16 %v399
        %v676 = vunpack.c.l.b16 %v400
        %v677 = vunpack.c.h.b16 %v400
        %v678 = vunpack.c.l.b16 %v401
        %v679 = vunpack.c.h.b16 %v401
        %v680 = vunpack.c.l.b16 %v402
        %v681 = vunpack.c.h.b16 %v402
        %v682 = vunpack.c.l.b16 %v403
        %v683 = vunpack.c.h.b16 %v403
        %v684 = vunpack.c.l.b16 %v404
        %v685 = vunpack.c.h.b16 %v404
        %v686 = vunpack.c.l.b16 %v405
        %v687 = vunpack.c.h.b16 %v405
        %v688 = vunpack.c.l.b16 %v406
        %v689 = vunpack.c.h.b16 %v406
        %v690 = vunpack.c.l.b16 %v407
        %v691 = vunpack.c.h.b16 %v407
        %v692 = vunpack.c.l.b16 %v408
        %v693 = vunpack.c.h.b16 %v408
        %v694 = vunpack.c.l.b16 %v409
        %v695 = vunpack.c.h.b16 %v409
        %v696 = vunpack.c.l.b16 %v410
        %v697 = vunpack.c.h.b16 %v410
        %v698 = vunpack.c.l.b16 %v411
        %v699 = vunpack.c.h.b16 %v411
        %v700 = vunpack.c.l.b16 %v412
        %v701 = vunpack.c.h.b16 %v412
        %v702 = vunpack.c.l.b16 %v413
        %v703 = vunpack.c.h.b16 %v413
        %v704 = vunpack.c.l.b16 %v414
        %v705 = vunpack.c.h.b16 %v414
        %v706 = vunpack.c.l.b16 %v415
        %v707 = vunpack.c.h.b16 %v415
        %v708 = vunpack.c.l.b16 %v416
        %v709 = vunpack.c.h.b16 %v416
        %v710 = vunpack.c.l.b16 %v417
        %v711 = vunpack.c.h.b16 %v417
        %v712 = vunpack.c.l.b16 %v418
        %v713 = vunpack.c.h.b16 %v418
        %v714 = vunpack.c.l.b16 %v419
        %v715 = vunpack.c.h.b16 %v419
        %v716 = vunpack.c.l.b16 %v420
        %v717 = vunpack.c.h.b16 %v420
        %v718 = vunpack.c.l.b16 %v421
        %v719 = vunpack.c.h.b16 %v421
        %v720 = vunpack.c.l.b16 %v422
        %v721 = vunpack.c.h.b16 %v422
        %v722 = vunpack.c.l.b16 %v423
        %v723 = vunpack.c.h.b16 %v423
        %v724 = vunpack.c.l.b16 %v424
        %v725 = vunpack.c.h.b16 %v424
        %v726 = vunpack.c.l.b16 %v425
        %v727 = vunpack.c.h.b16 %v425
        %v728 = vunpack.c.l.b16 %v426
        %v729 = vunpack.c.h.b16 %v426
        %v730 = vunpack.c.l.b16 %v427
        %v731 = vunpack.c.h.b16 %v427
        %v732 = vunpack.c.l.b16 %v428
        %v733 = vunpack.c.h.b16 %v428
        %v734 = vunpack.c.l.b16 %v429
        %v735 = vunpack.c.h.b16 %v429
        %v736 = vunpack.c.l.b16 %v430
        %v737 = vunpack.c.h.b16 %v430
        %v738 = vunpack.c.l.b16 %v431
        %v739 = vunpack.c.h.b16 %v431
        %v740 = vunpack.c.l.b16 %v432
        %v741 = vunpack.c.h.b16 %v432
        %v742 = vunpack.c.l.b16 %v433
        %v743 = vunpack.c.h.b16 %v433
        %v744 = vunpack.c.l.b16 %v434
        %v745 = vunpack.c.h.b16 %v434
        %v746 = vunpack.c.l.b16 %v435
        %v747 = vunpack.c.h.b16 %v435
        %v748 = vunpack.c.l.b16 %v436
        %v749 = vunpack.c.h.b16 %v436
        %v750 = vunpack.c.l.b16 %v437
        %v751 = vunpack.c.h.b16 %v437
        %v752 = vunpack.c.l.b16 %v438
        %v753 = vunpack.c.h.b16 %v438
        %v754 = vunpack.c.l.b16 %v439
        %v755 = vunpack.c.h.b16 %v439
        %v756 = vunpack.c.l.b16 %v440
        %v757 = vunpack.c.h.b16 %v440
        %v758 = vunpack.c.l.b16 %v441
        %v759 = vunpack.c.h.b16 %v441
        %v760 = vunpack.c.l.b16 %v442
        %v761 = vunpack.c.h.b16 %v442
        %v762 = vunpack.c.l.b16 %v443
        %v763 = vunpack.c.h.b16 %v443
        %v764 = vunpack.c.l.b16 %v444
        %v765 = vunpack.c.h.b16 %v444
        %v766 = vunpack.c.l.b16 %v445
        %v767 = vunpack.c.h.b16 %v445
        %v768 = vunpack.c.l.b16 %v446
        %v769 = vunpack.c.h.b16 %v446
        %v770 = vunpack.c.l.b16 %v447
        %v771 = vunpack.c.h.b16 %v447
        %v772 = vunpack.c.l.b16 %v448
        %v773 = vunpack.c.h.b16 %v448
        %v774 = vunpack.c.l.b16 %v449
        %v775 = vunpack.c.h.b16 %v449
        %v776 = vunpack.c.l.b16 %v450
        %v777 = vunpack.c.h.b16 %v450
        %v778 = vunpack.c.l.b16 %v451
        %v779 = vunpack.c.h.b16 %v451
        %v780 = vunpack.c.l.b16 %v452
        %v781 = vunpack.c.h.b16 %v452
        %v782 = vunpack.c.l.b16 %v453
        %v783 = vunpack.c.h.b16 %v453
        %v784 = vunpack.c.l.b16 %v454
        %v785 = vunpack.c.h.b16 %v454
        %v786 = vunpack.c.l.b16 %v455
        %v787 = vunpack.c.h.b16 %v455
        %v788 = vunpack.c.l.b16 %v456
        %v789 = vunpack.c.h.b16 %v456
        %v790 = vunpack.c.l.b16 %v457
        %v791 = vunpack.c.h.b16 %v457
        %v792 = vunpack.c.l.b16 %v458
        %v793 = vunpack.c.h.b16 %v458
        %v794 = vunpack.c.l.b16 %v459
        %v795 = vunpack.c.h.b16 %v459
        %v796 = vunpack.c.l.b16 %v460
        %v797 = vunpack.c.h.b16 %v460
        %v798 = vunpack.c.l.b16 %v461
        %v799 = vunpack.c.h.b16 %v461
        %v800 = vunpack.c.l.b16 %v462
        %v801 = vunpack.c.h.b16 %v462
        %v802 = vunpack.c.l.b16 %v463
        %v803 = vunpack.c.h.b16 %v463
        %v804 = vunpack.c.l.b16 %v464
        %v805 = vunpack.c.h.b16 %v464
        %v806 = vunpack.c.l.b16 %v465
        %v807 = vunpack.c.h.b16 %v465
        %v808 = vunpack.c.l.b16 %v466
        %v809 = vunpack.c.h.b16 %v466
        %v810 = vunpack.c.l.b16 %v467
        %v811 = vunpack.c.h.b16 %v467
        %v812 = vunpack.c.l.b16 %v468
        %v813 = vunpack.c.h.b16 %v468
        %v814 = vunpack.c.l.b16 %v469
        %v815 = vunpack.c.h.b16 %v469
        %v816 = vunpack.c.l.b16 %v470
        %v817 = vunpack.c.h.b16 %v470
        %v818 = vunpack.c.l.b16 %v471
        %v819 = vunpack.c.h.b16 %v471
        %v820 = vunpack.c.l.b16 %v472
        %v821 = vunpack.c.h.b16 %v472
        %v822 = vunpack.c.l.b16 %v473
        %v823 = vunpack.c.h.b16 %v473
        %v824 = vunpack.c.l.b16 %v474
        %v825 = vunpack.c.h.b16 %v474
        %v826 = vunpack.c.l.b16 %v475
        %v827 = vunpack.c.h.b16 %v475
        %v828 = vunpack.c.l.b16 %v476
        %v829 = vunpack.c.h.b16 %v476
        %v830 = vunpack.c.l.b16 %v477
        %v831 = vunpack.c.h.b16 %v477
        %v832 = vunpack.c.l.b16 %v478
        %v833 = vunpack.c.h.b16 %v478
        %v834 = vunpack.c.l.b16 %v479
        %v835 = vunpack.c.h.b16 %v479
        %v836 = vunpack.c.l.b16 %v480
        %v837 = vunpack.c.h.b16 %v480
        %v838 = vunpack.c.l.b16 %v481
        %v839 = vunpack.c.h.b16 %v481
        %v840 = vunpack.c.l.b16 %v482
        %v841 = vunpack.c.h.b16 %v482
        %v842 = vunpack.c.l.b16 %v483
        %v843 = vunpack.c.h.b16 %v483
        %v844 = vunpack.c.l.b16 %v484
        %v845 = vunpack.c.h.b16 %v484
        %v846 = vunpack.c.l.b16 %v485
        %v847 = vunpack.c.h.b16 %v485
        %v848 = vunpack.c.l.b16 %v486
        %v849 = vunpack.c.h.b16 %v486
        %v850 = vunpack.c.l.b16 %v487
        %v851 = vunpack.c.h.b16 %v487
        %v852 = vunpack.c.l.b16 %v488
        %v853 = vunpack.c.h.b16 %v488
        %v854 = vunpack.c.l.b16 %v489
        %v855 = vunpack.c.h.b16 %v489
        %v856 = vunpack.c.l.b16 %v490
        %v857 = vunpack.c.h.b16 %v490
        %v858 = vunpack.c.l.b16 %v491
        %v859 = vunpack.c.h.b16 %v491
        %v860 = vunpack.c.l.b16 %v492
        %v861 = vunpack.c.h.b16 %v492
        %v862 = vunpack.c.l.b16 %v493
        %v863 = vunpack.c.h.b16 %v493
        %v864 = vunpack.c.l.b16 %v494
        %v865 = vunpack.c.h.b16 %v494
        %v866 = vunpack.c.l.b16 %v495
        %v867 = vunpack.c.h.b16 %v495
        %v868 = vunpack.c.l.b16 %v496
        %v869 = vunpack.c.h.b16 %v496
        %v870 = vunpack.c.l.b16 %v497
        %v871 = vunpack.c.h.b16 %v497
        %v872 = vunpack.c.l.b16 %v498
        %v873 = vunpack.c.h.b16 %v498
        %v874 = vunpack.c.l.b16 %v499
        %v875 = vunpack.c.h.b16 %v499
        %v876 = vunpack.c.l.b16 %v500
        %v877 = vunpack.c.h.b16 %v500
        %v878 = vunpack.c.l.b16 %v501
        %v879 = vunpack.c.h.b16 %v501
        %v880 = vunpack.c.l.b16 %v502
        %v881 = vunpack.c.h.b16 %v502
        %v882 = vunpack.c.l.b16 %v503
        %v883 = vunpack.c.h.b16 %v503
        %v884 = vunpack.c.l.b16 %v504
        %v885 = vunpack.c.h.b16 %v504
        %v886 = vunpack.c.l.b16 %v505
        %v887 = vunpack.c.h.b16 %v505
        %v888 = vunpack.c.l.b16 %v506
        %v889 = vunpack.c.h.b16 %v506
        %v890 = vunpack.c.l.b16 %v507
        %v891 = vunpack.c.h.b16 %v507
        %v892 = vunpack.c.l.b16 %v508
        %v893 = vunpack.c.h.b16 %v508
        %v894 = vunpack.c.l.b16 %v509
        %v895 = vunpack.c.h.b16 %v509
        %v896 = vunpack.c.l.b16 %v510
        %v897 = vunpack.c.h.b16 %v510
        %v898 = vunpack.c.l.b16 %v511
        %v899 = vunpack.c.h.b16 %v511
        %v900 = vunpack.c.l.b16 %v512
        %v901 = vunpack.c.h.b16 %v512
        %v902 = vunpack.c.l.b16 %v513
        %v903 = vunpack.c.h.b16 %v513
        %v904 = vunpack.c.l.b16 %v514
        %v905 = vunpack.c.h.b16 %v514
        %v906 = vunpack.c.l.b16 %v515
        %v907 = vunpack.c.h.b16 %v515
        %v908 = vunpack.c.l.b16 %v516
        %v909 = vunpack.c.h.b16 %v516
        %v910 = vunpack.c.l.b16 %v517
        %v911 = vunpack.c.h.b16 %v517
        %v912 = vunpack.c.l.b16 %v518
        %v913 = vunpack.c.h.b16 %v518
        %v914 = vunpack.c.l.b16 %v519
        %v915 = vunpack.c.h.b16 %v519
        %v916 = vunpack.c.l.b16 %v520
        %v917 = vunpack.c.h.b16 %v520
        %v918 = vunpack.c.l.b16 %v521
        %v919 = vunpack.c.h.b16 %v521
        %v920 = vpack.c.b16 %v668, %v664
        %v921 = vpack.c.b16 %v669, %v665
        %v922 = vpack.c.b16 %v670, %v666
        %v923 = vpack.c.b16 %v671, %v667
        %v924 = vpack.c.b16 %v676, %v672
        %v925 = vpack.c.b16 %v677, %v673
        %v926 = vpack.c.b16 %v678, %v674
        %v927 = vpack.c.b16 %v679, %v675
        %v928 = vpack.c.b16 %v684, %v680
        %v929 = vpack.c.b16 %v685, %v681
        %v930 = vpack.c.b16 %v686, %v682
        %v931 = vpack.c.b16 %v687, %v683
        %v932 = vpack.c.b16 %v692, %v688
        %v933 = vpack.c.b16 %v693, %v689
        %v934 = vpack.c.b16 %v694, %v690
        %v935 = vpack.c.b16 %v695, %v691
        %v936 = vpack.c.b16 %v700, %v696
        %v937 = vpack.c.b16 %v701, %v697
        %v938 = vpack.c.b16 %v702, %v698
        %v939 = vpack.c.b16 %v703, %v699
        %v940 = vpack.c.b16 %v708, %v704
        %v941 = vpack.c.b16 %v709, %v705
        %v942 = vpack.c.b16 %v710, %v706
        %v943 = vpack.c.b16 %v711, %v707
        %v944 = vpack.c.b16 %v716, %v712
        %v945 = vpack.c.b16 %v717, %v713
        %v946 = vpack.c.b16 %v718, %v714
        %v947 = vpack.c.b16 %v719, %v715
        %v948 = vpack.c.b16 %v724, %v720
        %v949 = vpack.c.b16 %v725, %v721
        %v950 = vpack.c.b16 %v726, %v722
        %v951 = vpack.c.b16 %v727, %v723
        %v952 = vpack.c.b16 %v732, %v728
        %v953 = vpack.c.b16 %v733, %v729
        %v954 = vpack.c.b16 %v734, %v730
        %v955 = vpack.c.b16 %v735, %v731
        %v956 = vpack.c.b16 %v740, %v736
        %v957 = vpack.c.b16 %v741, %v737
        %v958 = vpack.c.b16 %v742, %v738
        %v959 = vpack.c.b16 %v743, %v739
        %v960 = vpack.c.b16 %v748, %v744
        %v961 = vpack.c.b16 %v749, %v745
        %v962 = vpack.c.b16 %v750, %v746
        %v963 = vpack.c.b16 %v751, %v747
        %v964 = vpack.c.b16 %v756, %v752
        %v965 = vpack.c.b16 %v757, %v753
        %v966 = vpack.c.b16 %v758, %v754
        %v967 = vpack.c.b16 %v759, %v755
        %v968 = vpack.c.b16 %v764, %v760
        %v969 = vpack.c.b16 %v765, %v761
        %v970 = vpack.c.b16 %v766, %v762
        %v971 = vpack.c.b16 %v767, %v763
        %v972 = vpack.c.b16 %v772, %v768
        %v973 = vpack.c.b16 %v773, %v769
        %v974 = vpack.c.b16 %v774, %v770
        %v975 = vpack.c.b16 %v775, %v771
        %v976 = vpack.c.b16 %v780, %v776
        %v977 = vpack.c.b16 %v781, %v777
        %v978 = vpack.c.b16 %v782, %v778
        %v979 = vpack.c.b16 %v783, %v779
        %v980 = vpack.c.b16 %v788, %v784
        %v981 = vpack.c.b16 %v789, %v785
        %v982 = vpack.c.b16 %v790, %v786
        %v983 = vpack.c.b16 %v791, %v787
        %v984 = vpack.c.b16 %v796, %v792
        %v985 = vpack.c.b16 %v797, %v793
        %v986 = vpack.c.b16 %v798, %v794
        %v987 = vpack.c.b16 %v799, %v795
        %v988 = vpack.c.b16 %v804, %v800
        %v989 = vpack.c.b16 %v805, %v801
        %v990 = vpack.c.b16 %v806, %v802
        %v991 = vpack.c.b16 %v807, %v803
        %v992 = vpack.c.b16 %v812, %v808
        %v993 = vpack.c.b16 %v813, %v809
        %v994 = vpack.c.b16 %v814, %v810
        %v995 = vpack.c.b16 %v815, %v811
        %v996 = vpack.c.b16 %v820, %v816
        %v997 = vpack.c.b16 %v821, %v817
        %v998 = vpack.c.b16 %v822, %v818
        %v999 = vpack.c.b16 %v823, %v819
        %v1000 = vpack.c.b16 %v828, %v824
        %v1001 = vpack.c.b16 %v829, %v825
        %v1002 = vpack.c.b16 %v830, %v826
        %v1003 = vpack.c.b16 %v831, %v827
        %v1004 = vpack.c.b16 %v836, %v832
        %v1005 = vpack.c.b16 %v837, %v833
        %v1006 = vpack.c.b16 %v838, %v834
        %v1007 = vpack.c.b16 %v839, %v835
        %v1008 = vpack.c.b16 %v844, %v840
        %v1009 = vpack.c.b16 %v845, %v841
        %v1010 = vpack.c.b16 %v846, %v842
        %v1011 = vpack.c.b16 %v847, %v843
        %v1012 = vpack.c.b16 %v852, %v848
        %v1013 = vpack.c.b16 %v853, %v849
        %v1014 = vpack.c.b16 %v854, %v850
        %v1015 = vpack.c.b16 %v855, %v851
        %v1016 = vpack.c.b16 %v860, %v856
        %v1017 = vpack.c.b16 %v861, %v857
        %v1018 = vpack.c.b16 %v862, %v858
        %v1019 = vpack.c.b16 %v863, %v859
        %v1020 = vpack.c.b16 %v868, %v864
        %v1021 = vpack.c.b16 %v869, %v865
        %v1022 = vpack.c.b16 %v870, %v866
        %v1023 = vpack.c.b16 %v871, %v867
        %v1024 = vpack.c.b16 %v876, %v872
        %v1025 = vpack.c.b16 %v877, %v873
        %v1026 = vpack.c.b16 %v878, %v874
        %v1027 = vpack.c.b16 %v879, %v875
        %v1028 = vpack.c.b16 %v884, %v880
        %v1029 = vpack.c.b16 %v885, %v881
        %v1030 = vpack.c.b16 %v886, %v882
        %v1031 = vpack.c.b16 %v887, %v883
        %v1032 = vpack.c.b16 %v892, %v888
        %v1033 = vpack.c.b16 %v893, %v889
        %v1034 = vpack.c.b16 %v894, %v890
        %v1035 = vpack.c.b16 %v895, %v891
        %v1036 = vpack.c.b16 %v900, %v896
        %v1037 = vpack.c.b16 %v901, %v897
        %v1038 = vpack.c.b16 %v902, %v898
        %v1039 = vpack.c.b16 %v903, %v899
        %v1040 = vpack.c.b16 %v908, %v904
        %v1041 = vpack.c.b16 %v909, %v905
        %v1042 = vpack.c.b16 %v910, %v906
        %v1043 = vpack.c.b16 %v911, %v907
        %v1044 = vpack.c.b16 %v916, %v912
        %v1045 = vpack.c.b16 %v917, %v913
        %v1046 = vpack.c.b16 %v918, %v914
        %v1047 = vpack.c.b16 %v919, %v915
        %1176 = vmatprep.subr.bf16.mxu0 %v921
        %1177 = vmatpush1.bf16.msra.mxu0 %v920
        %1178 = vmatprep.subr.bf16.mxu0 %v925
        %1179 = vmatpush1.bf16.msra.mxu0 %v924
        %1180 = vmatprep.subr.bf16.mxu0 %v929
        %1181 = vmatpush1.bf16.msra.mxu0 %v928
        %1182 = vmatprep.subr.bf16.mxu0 %v933
        %1183 = vmatpush1.bf16.msra.mxu0 %v932
        %1184 = vmatprep.subr.bf16.mxu0 %v937
        %1185 = vmatpush1.bf16.msra.mxu0 %v936
        %1186 = vmatprep.subr.bf16.mxu0 %v941
        %1187 = vmatpush1.bf16.msra.mxu0 %v940
        %1188 = vmatprep.subr.bf16.mxu0 %v945
        %1189 = vmatpush1.bf16.msra.mxu0 %v944
        %1190 = vmatprep.subr.bf16.mxu0 %v949
        %1191 = vmatpush1.bf16.msra.mxu0 %v948
        %1192 = vmatprep.subr.bf16.mxu0 %v953
        %1193 = vmatpush1.bf16.msra.mxu0 %v952
        %1194 = vmatprep.subr.bf16.mxu0 %v957
        %1195 = vmatpush1.bf16.msra.mxu0 %v956
        %1196 = vmatprep.subr.bf16.mxu0 %v961
        %1197 = vmatpush1.bf16.msra.mxu0 %v960
        %1198 = vmatprep.subr.bf16.mxu0 %v965
        %1199 = vmatpush1.bf16.msra.mxu0 %v964
        %1200 = vmatprep.subr.bf16.mxu0 %v969
        %1201 = vmatpush1.bf16.msra.mxu0 %v968
        %1202 = vmatprep.subr.bf16.mxu0 %v973
        %1203 = vmatpush1.bf16.msra.mxu0 %v972
        %1204 = vmatprep.subr.bf16.mxu0 %v977
        %1205 = vmatpush1.bf16.msra.mxu0 %v976
        %1206 = vmatprep.subr.bf16.mxu0 %v981
        %1207 = vmatpush1.bf16.msra.mxu0 %v980
        %1208 = vmatprep.mubr.bf16.mxu0 %v529
        %1209 = vmatmul.mubr.bf16.gmra.mrb[0].mxu0 %v528
        %v1210 = vpop.f32.mrb[0].mxu0
        %v1211 = vadd.f32 0.0, %v1210
        %v1212 = vpop.f32.mrb[0].mxu0
        %v1213 = vadd.f32 0.0, %v1212
        %v1214 = vpop.f32.mrb[0].mxu0
        %v1215 = vpop.f32.mrb[0].mxu0
        %1216 = vdwg.mxu0
        %1217 = vmatprep.subr.bf16.mxu0 %v985
        %1218 = vmatpush1.bf16.msra.mxu0 %v984
        %1219 = vmatprep.subr.bf16.mxu0 %v989
        %1220 = vmatpush1.bf16.msra.mxu0 %v988
        %1221 = vmatprep.subr.bf16.mxu0 %v993
        %1222 = vmatpush1.bf16.msra.mxu0 %v992
        %1223 = vmatprep.subr.bf16.mxu0 %v997
        %1224 = vmatpush1.bf16.msra.mxu0 %v996
        %1225 = vmatprep.subr.bf16.mxu0 %v1001
        %1226 = vmatpush1.bf16.msra.mxu0 %v1000
        %1227 = vmatprep.subr.bf16.mxu0 %v1005
        %1228 = vmatpush1.bf16.msra.mxu0 %v1004
        %1229 = vmatprep.subr.bf16.mxu0 %v1009
        %1230 = vmatpush1.bf16.msra.mxu0 %v1008
        %1231 = vmatprep.subr.bf16.mxu0 %v1013
        %1232 = vmatpush1.bf16.msra.mxu0 %v1012
        %1233 = vmatprep.subr.bf16.mxu0 %v1017
        %1234 = vmatpush1.bf16.msra.mxu0 %v1016
        %1235 = vmatprep.subr.bf16.mxu0 %v1021
        %1236 = vmatpush1.bf16.msra.mxu0 %v1020
        %1237 = vmatprep.subr.bf16.mxu0 %v1025
        %1238 = vmatpush1.bf16.msra.mxu0 %v1024
        %1239 = vmatprep.subr.bf16.mxu0 %v1029
        %1240 = vmatpush1.bf16.msra.mxu0 %v1028
        %1241 = vmatprep.subr.bf16.mxu0 %v1033
        %1242 = vmatpush1.bf16.msra.mxu0 %v1032
        %1243 = vmatprep.subr.bf16.mxu0 %v1037
        %1244 = vmatpush1.bf16.msra.mxu0 %v1036
        %1245 = vmatprep.subr.bf16.mxu0 %v1041
        %1246 = vmatpush1.bf16.msra.mxu0 %v1040
        %1247 = vmatprep.subr.bf16.mxu0 %v1045
        %1248 = vmatpush1.bf16.msra.mxu0 %v1044
        %1249 = vmatprep.mubr.bf16.mxu0 %v531
        %1250 = vmatmul.mubr.bf16.gmra.mrb[0].mxu0 %v530
        %v1251 = vpop.f32.mrb[0].mxu0
        %v1252 = vadd.f32 %v1211, %v1251
        %v1253 = vpop.f32.mrb[0].mxu0
        %v1254 = vadd.f32 %v1213, %v1253
        %v1255 = vpop.f32.mrb[0].mxu0
        %v1256 = vpop.f32.mrb[0].mxu0
        %1257 = vdwg.mxu0
        %1258 = vmatprep.subr.bf16.mxu0 %v923
        %1259 = vmatpush1.bf16.msra.mxu0 %v922
        %1260 = vmatprep.subr.bf16.mxu0 %v927
        %1261 = vmatpush1.bf16.msra.mxu0 %v926
        %1262 = vmatprep.subr.bf16.mxu0 %v931
        %1263 = vmatpush1.bf16.msra.mxu0 %v930
        %1264 = vmatprep.subr.bf16.mxu0 %v935
        %1265 = vmatpush1.bf16.msra.mxu0 %v934
        %1266 = vmatprep.subr.bf16.mxu0 %v939
        %1267 = vmatpush1.bf16.msra.mxu0 %v938
        %1268 = vmatprep.subr.bf16.mxu0 %v943
        %1269 = vmatpush1.bf16.msra.mxu0 %v942
        %1270 = vmatprep.subr.bf16.mxu0 %v947
        %1271 = vmatpush1.bf16.msra.mxu0 %v946
        %1272 = vmatprep.subr.bf16.mxu0 %v951
        %1273 = vmatpush1.bf16.msra.mxu0 %v950
        %1274 = vmatprep.subr.bf16.mxu0 %v955
        %1275 = vmatpush1.bf16.msra.mxu0 %v954
        %1276 = vmatprep.subr.bf16.mxu0 %v959
        %1277 = vmatpush1.bf16.msra.mxu0 %v958
        %1278 = vmatprep.subr.bf16.mxu0 %v963
        %1279 = vmatpush1.bf16.msra.mxu0 %v962
        %1280 = vmatprep.subr.bf16.mxu0 %v967
        %1281 = vmatpush1.bf16.msra.mxu0 %v966
        %1282 = vmatprep.subr.bf16.mxu0 %v971
        %1283 = vmatpush1.bf16.msra.mxu0 %v970
        %1284 = vmatprep.subr.bf16.mxu0 %v975
        %1285 = vmatpush1.bf16.msra.mxu0 %v974
        %1286 = vmatprep.subr.bf16.mxu0 %v979
        %1287 = vmatpush1.bf16.msra.mxu0 %v978
        %1288 = vmatprep.subr.bf16.mxu0 %v983
        %1289 = vmatpush1.bf16.msra.mxu0 %v982
        %1290 = vmatprep.mubr.bf16.mxu0 %v529
        %1291 = vmatmul.mubr.bf16.gmra.mrb[0].mxu0 %v528
        %v1292 = vpop.f32.mrb[0].mxu0
        %v1293 = vadd.f32 0.0, %v1292
        %v1294 = vpop.f32.mrb[0].mxu0
        %v1295 = vadd.f32 0.0, %v1294
        %v1296 = vpop.f32.mrb[0].mxu0
        %v1297 = vpop.f32.mrb[0].mxu0
        %1298 = vdwg.mxu0
        %1299 = vmatprep.subr.bf16.mxu0 %v987
        %1300 = vmatpush1.bf16.msra.mxu0 %v986
        %1301 = vmatprep.subr.bf16.mxu0 %v991
        %1302 = vmatpush1.bf16.msra.mxu0 %v990
        %1303 = vmatprep.subr.bf16.mxu0 %v995
        %1304 = vmatpush1.bf16.msra.mxu0 %v994
        %1305 = vmatprep.subr.bf16.mxu0 %v999
        %1306 = vmatpush1.bf16.msra.mxu0 %v998
        %1307 = vmatprep.subr.bf16.mxu0 %v1003
        %1308 = vmatpush1.bf16.msra.mxu0 %v1002
        %1309 = vmatprep.subr.bf16.mxu0 %v1007
        %1310 = vmatpush1.bf16.msra.mxu0 %v1006
        %1311 = vmatprep.subr.bf16.mxu0 %v1011
        %1312 = vmatpush1.bf16.msra.mxu0 %v1010
        %1313 = vmatprep.subr.bf16.mxu0 %v1015
        %1314 = vmatpush1.bf16.msra.mxu0 %v1014
        %1315 = vmatprep.subr.bf16.mxu0 %v1019
        %1316 = vmatpush1.bf16.msra.mxu0 %v1018
        %1317 = vmatprep.subr.bf16.mxu0 %v1023
        %1318 = vmatpush1.bf16.msra.mxu0 %v1022
        %1319 = vmatprep.subr.bf16.mxu0 %v1027
        %1320 = vmatpush1.bf16.msra.mxu0 %v1026
        %1321 = vmatprep.subr.bf16.mxu0 %v1031
        %1322 = vmatpush1.bf16.msra.mxu0 %v1030
        %1323 = vmatprep.subr.bf16.mxu0 %v1035
        %1324 = vmatpush1.bf16.msra.mxu0 %v1034
        %1325 = vmatprep.subr.bf16.mxu0 %v1039
        %1326 = vmatpush1.bf16.msra.mxu0 %v1038
        %1327 = vmatprep.subr.bf16.mxu0 %v1043
        %1328 = vmatpush1.bf16.msra.mxu0 %v1042
        %1329 = vmatprep.subr.bf16.mxu0 %v1047
        %1330 = vmatpush1.bf16.msra.mxu0 %v1046
        %1331 = vmatprep.mubr.bf16.mxu0 %v531
        %1332 = vmatmul.mubr.bf16.gmra.mrb[0].mxu0 %v530
        %v1333 = vpop.f32.mrb[0].mxu0
        %v1334 = vadd.f32 %v1293, %v1333
        %v1335 = vpop.f32.mrb[0].mxu0
        %v1336 = vadd.f32 %v1295, %v1335
        %v1337 = vpop.f32.mrb[0].mxu0
        %v1338 = vpop.f32.mrb[0].mxu0
        %1339 = vdwg.mxu0
        %v1340 = vadd.f32 %v388, %v1252
        %v1341 = vadd.f32 %v389, %v1254
        %v1342 = vadd.f32 %v390, %v1334
        %v1343 = vadd.f32 %v391, %v1336
        %1344 = vst [vmem:[#allocation2] sm:$0xff] %v1340
        %1345 = vst [vmem:[#allocation2 + $0x8] sm:$0xff] %v1341
        %1346 = vst [vmem:[#allocation2 + $0x10] sm:$0xff] %v1342
        %1347 = vst [vmem:[#allocation2 + $0x18] sm:$0xff] %v1343
        %p1348 = scmp.eq.s32.totalorder %s32, 1
        // Predicated region
        $region65: #{tpu_custom_call.1} parent=39 // pred_check
          %p1349 = pneg %p1348
        $region66: #{tpu_custom_call.1} parent=39 // pred_check_branch
          %1351 = sbr.rel (%p1349) target = $region68
        $region67: #{tpu_custom_call.1} parent=39 // pred_region
          %v1352 = vld [vmem:[#allocation2] sm:$0xff]
          %v1353 = vld [vmem:[#allocation2 + $0x8] sm:$0xff]
          %v1354 = vld [vmem:[#allocation2 + $0x10] sm:$0xff]
          %v1355 = vld [vmem:[#allocation2 + $0x18] sm:$0xff]
          %v1356 = vld [vmem:[%s314] sm:$0xf]
          %v1358 = vlaneseq
          %v1359 = vshrl.u32 %v1358, 7
          %v1360 = vsub.s32 0, %v1359
          %v1361 = vrot.slane %v1356, %v1360
          %v1362 = vlaneseq
          %v1363 = vshrl.u32 %v1362, 7
          %v1364 = vsub.s32 1, %v1363
          %v1365 = vrot.slane %v1356, %v1364
          %v1366 = vlaneseq
          %v1367 = vshrl.u32 %v1366, 7
          %v1368 = vsub.s32 2, %v1367
          %v1369 = vrot.slane %v1356, %v1368
          %v1370 = vlaneseq
          %v1371 = vshrl.u32 %v1370, 7
          %v1372 = vsub.s32 3, %v1371
          %v1373 = vrot.slane %v1356, %v1372
          %v1378 = vadd.f32 %v1352, %v1361
          %v1379 = vadd.f32 %v1353, %v1365
          %v1380 = vadd.f32 %v1354, %v1369
          %v1381 = vadd.f32 %v1355, %v1373
          %v1382 = vtanh.pop %v1378
          %v1383 = vtanh.pop %v1379
          %v1384 = vtanh.pop %v1380
          %v1385 = vtanh.pop %v1381
          %v1386 = vld [vmem:[%s5] sm:$0xff]
          %v1387 = vld [vmem:[%s323] sm:$0xf]
          %v1389 = vlaneseq
          %v1390 = vshrl.u32 %v1389, 7
          %v1391 = vsub.s32 0, %v1390
          %v1392 = vrot.slane %v1387, %v1391
          %v1393 = vlaneseq
          %v1394 = vshrl.u32 %v1393, 7
          %v1395 = vsub.s32 1, %v1394
          %v1396 = vrot.slane %v1387, %v1395
          %v1397 = vlaneseq
          %v1398 = vshrl.u32 %v1397, 7
          %v1399 = vsub.s32 2, %v1398
          %v1400 = vrot.slane %v1387, %v1399
          %v1401 = vlaneseq
          %v1402 = vshrl.u32 %v1401, 7
          %v1403 = vsub.s32 3, %v1402
          %v1404 = vrot.slane %v1387, %v1403
          %v1409 = vmul.f32 %v1382, %v1392
          %v1410 = vmul.f32 %v1383, %v1396
          %v1411 = vmul.f32 %v1384, %v1400
          %v1412 = vmul.f32 %v1385, %v1404
          %v1413 = vadd.f32 %v1409, %v1410
          %v1414 = vadd.f32 %v1413, %v1411
          %v1415 = vadd.f32 %v1414, %v1412
          %1416 = vadd.xlane.f32.xlu0 %v1415
          %v1417 = vpop.xlane.xlu0 %1416
          %v1418 = vadd.f32 %v1386, %v1417
          %vm1419 = vcmask 7168
          %1420 = vst.msk [vmem:[%s5] sm:$0xff] %vm1419, %v1418
        $region68: #{tpu_custom_call.1} parent=39 // pred_fallthru
          _
        // Predicated region
        $region69: #{tpu_custom_call.1} parent=39 // pred_check
          %p1421 = pneg %p179
        $region70: #{tpu_custom_call.1} parent=39 // pred_check_branch
          %1423 = sbr.rel (%p1421) target = $region72
        $region71: #{tpu_custom_call.1} parent=39 // pred_region
          _
        $region72: #{tpu_custom_call.1} parent=39 // pred_fallthru
          _
        // Predicated region
        $region73: #{tpu_custom_call.1} parent=39 // pred_check
          %p1424 = pneg %p179
        $region74: #{tpu_custom_call.1} parent=39 // pred_check_branch
          %1426 = sbr.rel (%p1424) target = $region76
        $region75: #{tpu_custom_call.1} parent=39 // pred_region
          _
        $region76: #{tpu_custom_call.1} parent=39 // pred_fallthru
          _
      $region40: #{tpu_custom_call.1} parent=5 // pred_fallthru
        _
      %p1427 = scmp.le.s32.totalorder 2, %s22
      // Predicated region
      $region77: #{tpu_custom_call.1} parent=5 // pred_check
        %p1428 = pneg %p1427
      $region78: #{tpu_custom_call.1} parent=5 // pred_check_branch
        %1430 = sbr.rel (%p1428) target = $region80
      $region79: #{tpu_custom_call.1} parent=5 // pred_region
        %s1431 = ssub.s32 %s22, 2
      $region80: #{tpu_custom_call.1} parent=5 // pred_fallthru
        _
    $region6: #{tpu_custom_call.1} parent=1 // loop_footer
      %s26 = sadd.s32 1, %s22
    $region7: #{tpu_custom_call.1} parent=1 // loop_footer_branch
      %21 = sbr.rel target = $region3
    $region8: #{tpu_custom_call.1} parent=1 // loop_exit
      _
    %1432 = vsyncpa [#allocation5], 1
    %s1433 = scalar_lea.sflag [#allocation5], 1
    %1434 = vsyncpa %s1433, 1
    %1435 = vsyncpa [#allocation7], 1
    %s1436 = scalar_lea.sflag [#allocation7], 1
    %1437 = vsyncpa %s1436, 1
    %1438 = vsyncpa [#allocation10], 1
    %s1439 = scalar_lea.sflag [#allocation10], 1
    %1440 = vsyncpa %s1439, 1

</llo_original>
